<compile_context>
chip_gen: v7x
topology: tpu7x:2x2x1
jax: 0.10.0
libtpu: 0.0.40
codegen_flags: <defaults>
</compile_context>

<pallas_src>
import math
import jax
import jax.numpy as jnp
from jax.experimental import pallas as pl
from jax.experimental.pallas import tpu as pltpu

# ----- small config consistent with the module -----
B, T = 2, 8
BT = B * T                      # 16 flattened (batch, time) rows
N_EMBD = 64
N_HEAD = 4
N_KV_HEAD = 2
HD = N_EMBD // N_HEAD           # 16
N_REP = N_HEAD // N_KV_HEAD     # 2
MULTIPLE_OF = 32
NORM_EPS = 1e-6
_h = int(2 * (4 * N_EMBD) / 3)
HIDDEN = MULTIPLE_OF * ((_h + MULTIPLE_OF - 1) // MULTIPLE_OF)   # 192
HIDDEN_PAD = 256                # zero-padded SwiGLU half -> 2 full vregs per slice
QKV_HALF = 4 * N_EMBD           # 256 lanes: [ q | k_rep | v_rep | pad ]
NG = QKV_HALF // HD             # 16 feature groups of HD lanes each
NEG_INF = -1e30                 # additive mask value


def block_kernel(x_ref, wln1_ref, wqkv_ref, cos_ref, sin_ref, amask_ref,
                 wo_ref, wln2_ref, wfc_ref, wproj_ref, o_ref):
    f32, bf16 = jnp.float32, jnp.bfloat16
    x = x_ref[...]                                                   # (16, 64) f32

    # ---- RMSNorm 1 (f32) ----
    ms = jnp.mean(x * x, axis=-1, keepdims=True)
    xn = (x * jax.lax.rsqrt(ms + NORM_EPS)) * wln1_ref[...]

    # ---- fused QKV projection: one MXU matmul, bf16 in / f32 acc ----
    # weight lanes: [  0:256) = [ q | k_rep | v_rep | 0 ]
    #               [256:512) = [ q@P | k_rep@P | 0 | 0 ]   (RoPE pair-swap copies)
    qkv = jnp.dot(xn.astype(bf16), wqkv_ref[...],
                  preferred_element_type=f32)                        # (16, 512)

    # ---- RoPE + v pass-through: ONE 256-lane FMA, 128-lane-aligned slices ----
    # (1/sqrt(hd) is folded into the q section of the f32 cos/sin tables.)
    rot = qkv[:, :QKV_HALF] * cos_ref[...] + qkv[:, QKV_HALF:] * sin_ref[...]  # (16,256)

    # ---- head-flatten (one grouped transpose, no lane-slice stacks) ----
    # rot[tok, g*HD+d]  ->  flat[g*BT+tok, d]   (g: 4 q-heads, 4 k-heads, 4 v-heads, pad)
    flat = jnp.transpose(rot)                    # (256, 16): [g*HD+d, tok]
    flat = flat.reshape(NG, HD, BT)              # (16, 16, 16): [g, d, tok]  (last dim kept)
    flat = jnp.transpose(flat, (0, 2, 1))        # (16, 16, 16): [g, tok, d]
    flat = flat.reshape(NG * BT, HD)             # (256, 16):   [g*BT+tok, d]

    q = flat[0 * N_HEAD * BT:1 * N_HEAD * BT].astype(bf16)           # (64, 16)
    k = flat[1 * N_HEAD * BT:2 * N_HEAD * BT].astype(bf16)           # (64, 16)
    v = flat[2 * N_HEAD * BT:3 * N_HEAD * BT].astype(bf16)           # (64, 16)

    # ---- attention: two big MXU matmuls + precomputed additive mask ----
    s = jnp.einsum('qd,kd->qk', q, k, preferred_element_type=f32)    # (64, 64)
    s = s + amask_ref[...]          # block-diag over heads + causal/batch-diag mask
    s = s - jnp.max(s, axis=-1, keepdims=True)
    p = jnp.exp(s)
    # approx=True is ~2^-12 rel. error; ample for the 1e-2 tolerance and rides the EUP.
    p = p * pl.reciprocal(jnp.sum(p, axis=-1, keepdims=True), approx=True)
    y = jnp.dot(p.astype(bf16), v, preferred_element_type=f32)       # (64, 16)

    # ---- output projection: per-head batched matmul, head reduction in f32 ----
    y3 = y.reshape(N_HEAD, BT, HD).astype(bf16)                      # [h, tok, d]
    attn = jnp.einsum('hqd,hdc->hqc', y3, wo_ref[...],
                      preferred_element_type=f32).sum(axis=0)        # (16, 64)
    x1 = x + attn

    # ---- RMSNorm 2 + fused, 128-lane-padded SwiGLU MLP ----
    ms2 = jnp.mean(x1 * x1, axis=-1, keepdims=True)
    xn2 = (x1 * jax.lax.rsqrt(ms2 + NORM_EPS)) * wln2_ref[...]
    h12 = jnp.dot(xn2.astype(bf16), wfc_ref[...],
                  preferred_element_type=f32)                        # (16, 512)
    h1 = h12[:, :HIDDEN_PAD]                                         # aligned slice
    h2 = h12[:, HIDDEN_PAD:]                                         # aligned slice
    g = h1 * (h2 * jax.nn.sigmoid(h2))                               # SwiGLU, f32
    out = jnp.dot(g.astype(bf16), wproj_ref[...], preferred_element_type=f32)
    o_ref[...] = x1 + out                                            # (16, 64)


def block_forward(x, kernel_params):
    # (B,T,C) <-> (BT,C) reshapes happen out here (free XLA metadata).
    x2 = x.reshape(BT, N_EMBD)

    def full_spec(a):
        return pl.BlockSpec(a.shape, lambda i, _nd=a.ndim: (0,) * _nd)

    in_specs = [full_spec(x2)] + [full_spec(p) for p in kernel_params]
    cost = pl.CostEstimate(flops=3_100_000, transcendentals=8_300,
                           bytes_accessed=230_000)
    out2 = pl.pallas_call(
        block_kernel,
        out_shape=jax.ShapeDtypeStruct((BT, N_EMBD), jnp.float32),
        grid=(1,),  # single step: all B*T rows ride every matmul together.  On v7x a
                    # 'parallel' split would feed the 2nd TensorCore once the work
                    # exceeds the ~0.35us step overhead; at B*T=16 keep 1 step.
        in_specs=in_specs,
        out_specs=pl.BlockSpec((BT, N_EMBD), lambda i: (0, 0)),
        compiler_params=pltpu.CompilerParams(dimension_semantics=("arbitrary",)),
        cost_estimate=cost,
    )(x2, *kernel_params)
    return out2.reshape(B, T, N_EMBD)


# ---------------- parameter / table construction (plain JAX host-side glue) ------------
def rope_tables(seq_len, hd, theta=10000.0):
    inv = 1.0 / (theta ** (jnp.arange(0, hd, 2, dtype=jnp.float32) / hd))   # (hd/2,)
    t = jnp.arange(seq_len, dtype=jnp.float32)
    freqs = jnp.outer(t, inv)                                               # (T, hd/2)
    cos, sin = jnp.cos(freqs), jnp.sin(freqs)
    cos_full = jnp.repeat(cos, 2, axis=-1)                                  # [c0,c0,c1,c1,..]
    sin_signed = jnp.stack([-sin, sin], axis=-1).reshape(seq_len, hd)       # [-s,+s,...]
    return cos_full, sin_signed, cos, sin


def pair_swap_matrix(n):
    perm = jnp.arange(n).reshape(-1, 2)[:, ::-1].reshape(-1)
    return jnp.eye(n, dtype=jnp.float32)[perm]


def build_additive_attention_mask():
    # (H*BT, H*BT) additive mask for the head-flattened score matrix:
    # allowed iff same head AND same batch element AND key position <= query position.
    idx = jnp.arange(N_HEAD * BT)
    h = idx // BT
    tok = idx % BT
    b = tok // T
    t = tok % T
    allowed = ((h[:, None] == h[None, :]) &
               (b[:, None] == b[None, :]) &
               (t[None, :] <= t[:, None]))
    return jnp.where(allowed, 0.0, NEG_INF).astype(jnp.float32)


def make_params(key):
    ks = jax.random.split(key, 7)
    s = 0.02
    wln1 = jnp.ones((1, N_EMBD), jnp.float32)
    wln2 = jnp.ones((1, N_EMBD), jnp.float32)
    wq = jax.random.normal(ks[0], (N_EMBD, N_HEAD * HD), jnp.float32) * s
    wk = jax.random.normal(ks[1], (N_EMBD, N_KV_HEAD * HD), jnp.float32) * s
    wv = jax.random.normal(ks[2], (N_EMBD, N_KV_HEAD * HD), jnp.float32) * s
    wo = jax.random.normal(ks[3], (N_EMBD, N_EMBD), jnp.float32) * s
    wfc = jax.random.normal(ks[4], (N_EMBD, HIDDEN), jnp.float32) * s
    wfc2 = jax.random.normal(ks[5], (N_EMBD, HIDDEN), jnp.float32) * s
    wproj = jax.random.normal(ks[6], (HIDDEN, N_EMBD), jnp.float32) * s

    # ---- host-side fusion / folding for the kernel ----
    P = pair_swap_matrix(N_EMBD)                      # RoPE interleaved pair-swap
    rep = lambda w: jnp.repeat(w.reshape(N_EMBD, N_KV_HEAD, HD), N_REP,
                               axis=1).reshape(N_EMBD, N_HEAD * HD)   # GQA repeat_kv
    wk_rep, wv_rep = rep(wk), rep(wv)
    z64 = jnp.zeros((N_EMBD, N_EMBD), jnp.float32)
    # fused QKV weight, every group 128-lane aligned:
    #   lanes [  0:256) = [ q | k_rep | v_rep | 0 ]
    #   lanes [256:512) = [ q@P | k_rep@P | 0 | 0 ]
    w_qkv = jnp.concatenate(
        [wq, wk_rep, wv_rep, z64, wq @ P, wk_rep @ P, z64, z64],
        axis=1).astype(jnp.bfloat16)                                  # (64, 512)

    wo_r = wo.reshape(N_HEAD, HD, N_EMBD).astype(jnp.bfloat16)        # per-head c_proj

    zf = jnp.zeros((N_EMBD, HIDDEN_PAD - HIDDEN), jnp.float32)
    w_fc = jnp.concatenate([wfc, zf, wfc2, zf], axis=1).astype(jnp.bfloat16)   # (64, 512)
    w_proj = jnp.concatenate(
        [wproj, jnp.zeros((HIDDEN_PAD - HIDDEN, N_EMBD), jnp.float32)],
        axis=0).astype(jnp.bfloat16)                                  # (256, 64)

    # RoPE tables widened to the 256-lane QKV halves.  1/sqrt(hd) is folded into the
    # q section in f32 (exact; avoids bf16 rounding of the folded scale).
    cos_h, sin_h, cos_raw, sin_raw = rope_tables(T, HD)
    scale = 1.0 / math.sqrt(HD)
    cos_q = jnp.tile(cos_h, (1, N_HEAD)) * scale                      # (T, 64)
    cos_k = jnp.tile(cos_h, (1, N_HEAD))
    sin_q = jnp.tile(sin_h, (1, N_HEAD)) * scale
    sin_k = jnp.tile(sin_h, (1, N_HEAD))
    ones_v = jnp.ones((T, N_EMBD), jnp.float32)                       # v pass-through
    zeros_g = jnp.zeros((T, N_EMBD), jnp.float32)
    cos_row = jnp.concatenate([cos_q, cos_k, ones_v, zeros_g], axis=1)   # (T, 256)
    sin_row = jnp.concatenate([sin_q, sin_k, zeros_g, zeros_g], axis=1)  # (T, 256)
    cos_tab = jnp.tile(cos_row, (B, 1))                               # (16, 256)
    sin_tab = jnp.tile(sin_row, (B, 1))

    amask = build_additive_attention_mask()                           # (64, 64)

    kernel_params = (wln1, w_qkv, cos_tab, sin_tab, amask, wo_r, wln2, w_fc, w_proj)
    ref_params = (wln1, wq, wk, wv, wo, wfc, wfc2, wproj, wln2)
    return kernel_params, ref_params, (cos_raw, sin_raw)


# ---------------- pure-JAX reference (mirrors the PyTorch forward exactly) -------------
def ref_forward(x, ref_params, cos_raw, sin_raw):
    (wln1, wq, wk, wv, wo, wfc, wfc2, wproj, wln2) = ref_params
    hp = jax.lax.Precision.HIGHEST

    def rms(t, w):
        return t * jax.lax.rsqrt(jnp.mean(t * t, axis=-1, keepdims=True) + NORM_EPS) * w

    def rope(t):  # t (B,T,nh,hd), interleaved-pair complex multiply
        tr = t.reshape(*t.shape[:-1], -1, 2)
        t0, t1 = tr[..., 0], tr[..., 1]
        c = cos_raw[None, :, None, :]
        sn = sin_raw[None, :, None, :]
        o0 = t0 * c - t1 * sn
        o1 = t0 * sn + t1 * c
        return jnp.stack([o0, o1], axis=-1).reshape(t.shape)

    xn = rms(x, wln1[0])
    q = jnp.einsum('btc,cd->btd', xn, wq, precision=hp).reshape(B, T, N_HEAD, HD)
    k = jnp.einsum('btc,cd->btd', xn, wk, precision=hp).reshape(B, T, N_KV_HEAD, HD)
    v = jnp.einsum('btc,cd->btd', xn, wv, precision=hp).reshape(B, T, N_KV_HEAD, HD)
    q, k = rope(q), rope(k)
    k = jnp.repeat(k, N_REP, axis=2)
    v = jnp.repeat(v, N_REP, axis=2)
    q, k, v = (jnp.transpose(t, (0, 2, 1, 3)) for t in (q, k, v))   # (B,H,T,HD)
    s = jnp.einsum('bhqd,bhkd->bhqk', q, k, precision=hp) / math.sqrt(HD)
    mask = jnp.triu(jnp.ones((T, T), bool), k=1)
    s = jnp.where(mask[None, None], jnp.finfo(jnp.float32).min, s)
    p = jax.nn.softmax(s, axis=-1)
    y = jnp.einsum('bhqk,bhkd->bhqd', p, v, precision=hp)
    y = jnp.transpose(y, (0, 2, 1, 3)).reshape(B, T, N_EMBD)
    y = jnp.einsum('btc,cd->btd', y, wo, precision=hp)
    x1 = x + y
    xn2 = rms(x1, wln2[0])
    h1 = jnp.einsum('btc,cd->btd', xn2, wfc, precision=hp)
    h2 = jnp.einsum('btc,cd->btd', xn2, wfc2, precision=hp)
    h2 = h2 * jax.nn.sigmoid(h2)
    return x1 + jnp.einsum('btd,dc->btc', h1 * h2, wproj, precision=hp)


if __name__ == "__main__":
    key = jax.random.PRNGKey(0)
    kx, kp = jax.random.split(key)
    x = jax.random.normal(kx, (B, T, N_EMBD), dtype=jnp.float32)
    kernel_params, ref_params, (cos_raw, sin_raw) = make_params(kp)

    out = jax.block_until_ready(block_forward(x, kernel_params))
    assert out.shape == (B, T, N_EMBD) and out.dtype == jnp.float32

    ref = ref_forward(x, ref_params, cos_raw, sin_raw)
    err = float(jnp.max(jnp.abs(out - ref)))
    if not err < 1e-2:
        raise AssertionError(f"kernel/reference mismatch: max abs err = {err}")
    print("KERNEL_OK")
</pallas_src>

<mosaic_0001>
module attributes {stable_mosaic.version = 11 : i64} {
  func.func @block_kernel(%arg0: i32, %arg1: memref<16x64xf32, #tpu.memory_space<vmem>>, %arg2: memref<1x64xf32, #tpu.memory_space<vmem>>, %arg3: memref<64x512xbf16, #tpu.memory_space<vmem>>, %arg4: memref<16x256xf32, #tpu.memory_space<vmem>>, %arg5: memref<16x256xf32, #tpu.memory_space<vmem>>, %arg6: memref<64x64xf32, #tpu.memory_space<vmem>>, %arg7: memref<4x16x64xbf16, #tpu.memory_space<vmem>>, %arg8: memref<1x64xf32, #tpu.memory_space<vmem>>, %arg9: memref<64x512xbf16, #tpu.memory_space<vmem>>, %arg10: memref<256x64xbf16, #tpu.memory_space<vmem>>, %arg11: memref<16x64xf32, #tpu.memory_space<vmem>>) attributes {dimension_semantics = [#tpu.dimension_semantics<arbitrary>], iteration_bounds = array<i64: 1>, scalar_prefetch = 0 : i64, scratch_operands = 0 : i64, tpu.core_type = #tpu.core_type<tc>, window_params = [{pipeline_mode = #tpu.pipeline_mode<synchronous>, transform_indices = @transform_0, window_bounds = array<i64: 16, 64>}, {pipeline_mode = #tpu.pipeline_mode<synchronous>, transform_indices = @transform_1, window_bounds = array<i64: 1, 64>}, {pipeline_mode = #tpu.pipeline_mode<synchronous>, transform_indices = @transform_2, window_bounds = array<i64: 64, 512>}, {pipeline_mode = #tpu.pipeline_mode<synchronous>, transform_indices = @transform_3, window_bounds = array<i64: 16, 256>}, {pipeline_mode = #tpu.pipeline_mode<synchronous>, transform_indices = @transform_4, window_bounds = array<i64: 16, 256>}, {pipeline_mode = #tpu.pipeline_mode<synchronous>, transform_indices = @transform_5, window_bounds = array<i64: 64, 64>}, {pipeline_mode = #tpu.pipeline_mode<synchronous>, transform_indices = @transform_6, window_bounds = array<i64: 4, 16, 64>}, {pipeline_mode = #tpu.pipeline_mode<synchronous>, transform_indices = @transform_7, window_bounds = array<i64: 1, 64>}, {pipeline_mode = #tpu.pipeline_mode<synchronous>, transform_indices = @transform_8, window_bounds = array<i64: 64, 512>}, {pipeline_mode = #tpu.pipeline_mode<synchronous>, transform_indices = @transform_9, window_bounds = array<i64: 256, 64>}, {pipeline_mode = #tpu.pipeline_mode<synchronous>, transform_indices = @transform_10, window_bounds = array<i64: 16, 64>}]} {
    %c0 = arith.constant 0 : index
    %c0_0 = arith.constant 0 : index
    %0 = vector.load %arg1[%c0, %c0_0] : memref<16x64xf32, #tpu.memory_space<vmem>>, vector<16x64xf32>
    %1 = arith.mulf %0, %0 : vector<16x64xf32>
    %cst = arith.constant dense<0.000000e+00> : vector<16xf32>
    %2 = vector.multi_reduction <add>, %1, %cst [1] : vector<16x64xf32> to vector<16xf32>
    %3 = vector.shape_cast %2 : vector<16xf32> to vector<16x1xf32>
    %cst_1 = arith.constant 6.400000e+01 : f32
    %4 = vector.broadcast %cst_1 : f32 to vector<16x1xf32>
    %5 = arith.divf %3, %4 : vector<16x1xf32>
    %cst_2 = arith.constant 9.99999997E-7 : f32
    %6 = vector.broadcast %cst_2 : f32 to vector<16x1xf32>
    %7 = arith.addf %5, %6 : vector<16x1xf32>
    %8 = math.rsqrt %7 : vector<16x1xf32>
    %9 = vector.broadcast %8 : vector<16x1xf32> to vector<16x64xf32>
    %10 = arith.mulf %0, %9 : vector<16x64xf32>
    %c0_3 = arith.constant 0 : index
    %c0_4 = arith.constant 0 : index
    %11 = vector.load %arg2[%c0_3, %c0_4] : memref<1x64xf32, #tpu.memory_space<vmem>>, vector<1x64xf32>
    %12 = vector.broadcast %11 : vector<1x64xf32> to vector<16x64xf32>
    %13 = arith.mulf %10, %12 : vector<16x64xf32>
    %14 = arith.truncf %13 : vector<16x64xf32> to vector<16x64xbf16>
    %c0_5 = arith.constant 0 : index
    %c0_6 = arith.constant 0 : index
    %15 = vector.load %arg3[%c0_5, %c0_6] : memref<64x512xbf16, #tpu.memory_space<vmem>>, vector<64x512xbf16>
    %cst_7 = arith.constant dense<0.000000e+00> : vector<16x512xf32>
    %16 = tpu.matmul %14, %15, %cst_7 {dimension_numbers = #tpu.dot_dimension_numbers<[1], [0], [0], [1], [0, 0, 1, 1], [], []>} : vector<16x64xbf16>, vector<64x512xbf16>, vector<16x512xf32> -> vector<16x512xf32>
    %17 = vector.extract_strided_slice %16 {offsets = [0, 0], sizes = [16, 256], strides = [1, 1]} : vector<16x512xf32> to vector<16x256xf32>
    %c0_8 = arith.constant 0 : index
    %c0_9 = arith.constant 0 : index
    %18 = vector.load %arg4[%c0_8, %c0_9] : memref<16x256xf32, #tpu.memory_space<vmem>>, vector<16x256xf32>
    %19 = arith.mulf %17, %18 : vector<16x256xf32>
    %20 = vector.extract_strided_slice %16 {offsets = [0, 256], sizes = [16, 256], strides = [1, 1]} : vector<16x512xf32> to vector<16x256xf32>
    %c0_10 = arith.constant 0 : index
    %c0_11 = arith.constant 0 : index
    %21 = vector.load %arg5[%c0_10, %c0_11] : memref<16x256xf32, #tpu.memory_space<vmem>>, vector<16x256xf32>
    %22 = arith.mulf %20, %21 : vector<16x256xf32>
    %23 = arith.addf %19, %22 : vector<16x256xf32>
    %24 = tpu.transpose %23, [1, 0] : vector<16x256xf32> -> vector<256x16xf32>
    %25 = vector.shape_cast %24 : vector<256x16xf32> to vector<16x16x16xf32>
    %26 = tpu.transpose %25, [0, 2, 1] : vector<16x16x16xf32> -> vector<16x16x16xf32>
    %27 = vector.shape_cast %26 : vector<16x16x16xf32> to vector<256x16xf32>
    %28 = vector.extract_strided_slice %27 {offsets = [0, 0], sizes = [64, 16], strides = [1, 1]} : vector<256x16xf32> to vector<64x16xf32>
    %29 = arith.truncf %28 : vector<64x16xf32> to vector<64x16xbf16>
    %30 = vector.extract_strided_slice %27 {offsets = [64, 0], sizes = [64, 16], strides = [1, 1]} : vector<256x16xf32> to vector<64x16xf32>
    %31 = arith.truncf %30 : vector<64x16xf32> to vector<64x16xbf16>
    %32 = vector.extract_strided_slice %27 {offsets = [128, 0], sizes = [64, 16], strides = [1, 1]} : vector<256x16xf32> to vector<64x16xf32>
    %33 = arith.truncf %32 : vector<64x16xf32> to vector<64x16xbf16>
    "tpu.trace_start"() <{level = 10 : i32, message = "qd,kd->qk"}> : () -> ()
    %cst_12 = arith.constant dense<0.000000e+00> : vector<64x64xf32>
    %34 = tpu.matmul %29, %31, %cst_12 {dimension_numbers = #tpu.dot_dimension_numbers<[1], [1], [0], [0], [0, 0, 1, 0], [], []>} : vector<64x16xbf16>, vector<64x16xbf16>, vector<64x64xf32> -> vector<64x64xf32>
    "tpu.trace_stop"() : () -> ()
    %c0_13 = arith.constant 0 : index
    %c0_14 = arith.constant 0 : index
    %35 = vector.load %arg6[%c0_13, %c0_14] : memref<64x64xf32, #tpu.memory_space<vmem>>, vector<64x64xf32>
    %36 = arith.addf %34, %35 : vector<64x64xf32>
    %cst_15 = arith.constant dense<0xFF800000> : vector<64xf32>
    %37 = vector.multi_reduction <maximumf>, %36, %cst_15 [1] : vector<64x64xf32> to vector<64xf32>
    %38 = vector.shape_cast %37 : vector<64xf32> to vector<64x1xf32>
    %39 = vector.broadcast %38 : vector<64x1xf32> to vector<64x64xf32>
    %40 = arith.subf %36, %39 : vector<64x64xf32>
    %41 = math.exp %40 : vector<64x64xf32>
    %cst_16 = arith.constant dense<0.000000e+00> : vector<64xf32>
    %42 = vector.multi_reduction <add>, %41, %cst_16 [1] : vector<64x64xf32> to vector<64xf32>
    %43 = vector.shape_cast %42 : vector<64xf32> to vector<64x1xf32>
    %44 = tpu.reciprocal %43 {approx = true} : vector<64x1xf32> -> vector<64x1xf32>
    %45 = vector.broadcast %44 : vector<64x1xf32> to vector<64x64xf32>
    %46 = arith.mulf %41, %45 : vector<64x64xf32>
    %47 = arith.truncf %46 : vector<64x64xf32> to vector<64x64xbf16>
    %cst_17 = arith.constant dense<0.000000e+00> : vector<64x16xf32>
    %48 = tpu.matmul %47, %33, %cst_17 {dimension_numbers = #tpu.dot_dimension_numbers<[1], [0], [0], [1], [0, 0, 1, 1], [], []>} : vector<64x64xbf16>, vector<64x16xbf16>, vector<64x16xf32> -> vector<64x16xf32>
    %49 = vector.shape_cast %48 : vector<64x16xf32> to vector<4x16x16xf32>
    %50 = arith.truncf %49 : vector<4x16x16xf32> to vector<4x16x16xbf16>
    %c0_18 = arith.constant 0 : index
    %c0_19 = arith.constant 0 : index
    %c0_20 = arith.constant 0 : index
    %51 = vector.load %arg7[%c0_18, %c0_19, %c0_20] : memref<4x16x64xbf16, #tpu.memory_space<vmem>>, vector<4x16x64xbf16>
    "tpu.trace_start"() <{level = 10 : i32, message = "hqd,hdc->hqc"}> : () -> ()
    %cst_21 = arith.constant dense<0.000000e+00> : vector<4x16x64xf32>
    %52 = tpu.matmul %50, %51, %cst_21 {dimension_numbers = #tpu.dot_dimension_numbers<[2], [1], [1], [2], [0, 0, 0, 1, 1, 2], [0], [0]>} : vector<4x16x16xbf16>, vector<4x16x64xbf16>, vector<4x16x64xf32> -> vector<4x16x64xf32>
    "tpu.trace_stop"() : () -> ()
    %cst_22 = arith.constant dense<0.000000e+00> : vector<16x64xf32>
    %53 = vector.multi_reduction <add>, %52, %cst_22 [0] : vector<4x16x64xf32> to vector<16x64xf32>
    %54 = arith.addf %0, %53 : vector<16x64xf32>
    %55 = arith.mulf %54, %54 : vector<16x64xf32>
    %cst_23 = arith.constant dense<0.000000e+00> : vector<16xf32>
    %56 = vector.multi_reduction <add>, %55, %cst_23 [1] : vector<16x64xf32> to vector<16xf32>
    %57 = vector.shape_cast %56 : vector<16xf32> to vector<16x1xf32>
    %cst_24 = arith.constant 6.400000e+01 : f32
    %58 = vector.broadcast %cst_24 : f32 to vector<16x1xf32>
    %59 = arith.divf %57, %58 : vector<16x1xf32>
    %cst_25 = arith.constant 9.99999997E-7 : f32
    %60 = vector.broadcast %cst_25 : f32 to vector<16x1xf32>
    %61 = arith.addf %59, %60 : vector<16x1xf32>
    %62 = math.rsqrt %61 : vector<16x1xf32>
    %63 = vector.broadcast %62 : vector<16x1xf32> to vector<16x64xf32>
    %64 = arith.mulf %54, %63 : vector<16x64xf32>
    %c0_26 = arith.constant 0 : index
    %c0_27 = arith.constant 0 : index
    %65 = vector.load %arg8[%c0_26, %c0_27] : memref<1x64xf32, #tpu.memory_space<vmem>>, vector<1x64xf32>
    %66 = vector.broadcast %65 : vector<1x64xf32> to vector<16x64xf32>
    %67 = arith.mulf %64, %66 : vector<16x64xf32>
    %68 = arith.truncf %67 : vector<16x64xf32> to vector<16x64xbf16>
    %c0_28 = arith.constant 0 : index
    %c0_29 = arith.constant 0 : index
    %69 = vector.load %arg9[%c0_28, %c0_29] : memref<64x512xbf16, #tpu.memory_space<vmem>>, vector<64x512xbf16>
    %cst_30 = arith.constant dense<0.000000e+00> : vector<16x512xf32>
    %70 = tpu.matmul %68, %69, %cst_30 {dimension_numbers = #tpu.dot_dimension_numbers<[1], [0], [0], [1], [0, 0, 1, 1], [], []>} : vector<16x64xbf16>, vector<64x512xbf16>, vector<16x512xf32> -> vector<16x512xf32>
    %71 = vector.extract_strided_slice %70 {offsets = [0, 0], sizes = [16, 256], strides = [1, 1]} : vector<16x512xf32> to vector<16x256xf32>
    %72 = vector.extract_strided_slice %70 {offsets = [0, 256], sizes = [16, 256], strides = [1, 1]} : vector<16x512xf32> to vector<16x256xf32>
    %73 = arith.negf %72 : vector<16x256xf32>
    %74 = math.exp %73 : vector<16x256xf32>
    %cst_31 = arith.constant 1.000000e+00 : f32
    %75 = vector.broadcast %cst_31 : f32 to vector<16x256xf32>
    %76 = arith.addf %75, %74 : vector<16x256xf32>
    %77 = arith.divf %75, %76 : vector<16x256xf32>
    %78 = arith.mulf %72, %77 : vector<16x256xf32>
    %79 = arith.mulf %71, %78 : vector<16x256xf32>
    %80 = arith.truncf %79 : vector<16x256xf32> to vector<16x256xbf16>
    %c0_32 = arith.constant 0 : index
    %c0_33 = arith.constant 0 : index
    %81 = vector.load %arg10[%c0_32, %c0_33] : memref<256x64xbf16, #tpu.memory_space<vmem>>, vector<256x64xbf16>
    %cst_34 = arith.constant dense<0.000000e+00> : vector<16x64xf32>
    %82 = tpu.matmul %80, %81, %cst_34 {dimension_numbers = #tpu.dot_dimension_numbers<[1], [0], [0], [1], [0, 0, 1, 1], [], []>} : vector<16x256xbf16>, vector<256x64xbf16>, vector<16x64xf32> -> vector<16x64xf32>
    %83 = arith.addf %54, %82 : vector<16x64xf32>
    %c0_35 = arith.constant 0 : index
    %c0_36 = arith.constant 0 : index
    %84 = vector.load %arg11[%c0_35, %c0_36] : memref<16x64xf32, #tpu.memory_space<vmem>>, vector<16x64xf32>
    tpu.vector_store %arg11[%c0_35, %c0_36], %83 {strides = array<i32>} : memref<16x64xf32, #tpu.memory_space<vmem>>, vector<16x64xf32>,
    return
  }
  func.func @transform_0(%arg0: i32) -> (i32, i32) {
    %c0_i32 = arith.constant 0 : i32
    %c0_i32_0 = arith.constant 0 : i32
    %c0_i32_1 = arith.constant 0 : i32
    return %c0_i32, %c0_i32_0 : i32, i32
  }
  func.func @transform_1(%arg0: i32) -> (i32, i32) {
    %c0_i32 = arith.constant 0 : i32
    %c0_i32_0 = arith.constant 0 : i32
    %c0_i32_1 = arith.constant 0 : i32
    return %c0_i32, %c0_i32_0 : i32, i32
  }
  func.func @transform_2(%arg0: i32) -> (i32, i32) {
    %c0_i32 = arith.constant 0 : i32
    %c0_i32_0 = arith.constant 0 : i32
    %c0_i32_1 = arith.constant 0 : i32
    return %c0_i32, %c0_i32_0 : i32, i32
  }
  func.func @transform_3(%arg0: i32) -> (i32, i32) {
    %c0_i32 = arith.constant 0 : i32
    %c0_i32_0 = arith.constant 0 : i32
    %c0_i32_1 = arith.constant 0 : i32
    return %c0_i32, %c0_i32_0 : i32, i32
  }
  func.func @transform_4(%arg0: i32) -> (i32, i32) {
    %c0_i32 = arith.constant 0 : i32
    %c0_i32_0 = arith.constant 0 : i32
    %c0_i32_1 = arith.constant 0 : i32
    return %c0_i32, %c0_i32_0 : i32, i32
  }
  func.func @transform_5(%arg0: i32) -> (i32, i32) {
    %c0_i32 = arith.constant 0 : i32
    %c0_i32_0 = arith.constant 0 : i32
    %c0_i32_1 = arith.constant 0 : i32
    return %c0_i32, %c0_i32_0 : i32, i32
  }
  func.func @transform_6(%arg0: i32) -> (i32, i32, i32) {
    %c0_i32 = arith.constant 0 : i32
    %c0_i32_0 = arith.constant 0 : i32
    %c0_i32_1 = arith.constant 0 : i32
    %c0_i32_2 = arith.constant 0 : i32
    return %c0_i32, %c0_i32_0, %c0_i32_1 : i32, i32, i32
  }
  func.func @transform_7(%arg0: i32) -> (i32, i32) {
    %c0_i32 = arith.constant 0 : i32
    %c0_i32_0 = arith.constant 0 : i32
    %c0_i32_1 = arith.constant 0 : i32
    return %c0_i32, %c0_i32_0 : i32, i32
  }
  func.func @transform_8(%arg0: i32) -> (i32, i32) {
    %c0_i32 = arith.constant 0 : i32
    %c0_i32_0 = arith.constant 0 : i32
    %c0_i32_1 = arith.constant 0 : i32
    return %c0_i32, %c0_i32_0 : i32, i32
  }
  func.func @transform_9(%arg0: i32) -> (i32, i32) {
    %c0_i32 = arith.constant 0 : i32
    %c0_i32_0 = arith.constant 0 : i32
    %c0_i32_1 = arith.constant 0 : i32
    return %c0_i32, %c0_i32_0 : i32, i32
  }
  func.func @transform_10(%arg0: i32) -> (i32, i32) {
    %c0_i32 = arith.constant 0 : i32
    %c0_i32_0 = arith.constant 0 : i32
    %c0_i32_1 = arith.constant 0 : i32
    return %c0_i32, %c0_i32_0 : i32, i32
  }
}

</mosaic_0001>

<llo_original>
// kernel: tpu_custom_call.1
$region0: #{tpu_custom_call.1}
  #allocation0 [shape = 'u32[]', space=smem, size = 0x4, offset = 0x4, fixed_abs, tag = 'smem constant byte address 0x4 - core index']
  #allocation1 [shape = 'u32[144,128]{1,0:T(1,128)}', space=vmem, size = 0x12000, scoped, tag = 'internal scratch']
  %s0 = inlined_call_operand.hbm [shape: f32[16,64], index: 0, kind: input, shape index: {}]
  %s1 = inlined_call_operand.vmem [shape: f32[1,64], index: 1, kind: input, shape index: {}]
  %s2 = inlined_call_operand.vmem [shape: bf16[64,512], index: 2, kind: input, shape index: {}]
  %s3 = inlined_call_operand.hbm [shape: f32[16,256], index: 3, kind: input, shape index: {}]
  %s4 = inlined_call_operand.hbm [shape: f32[16,256], index: 4, kind: input, shape index: {}]
  %s5 = inlined_call_operand.vmem [shape: f32[64,64], index: 5, kind: input, shape index: {}]
  %s6 = inlined_call_operand.hbm [shape: bf16[4,16,64], index: 6, kind: input, shape index: {}]
  %s7 = inlined_call_operand.vmem [shape: f32[1,64], index: 7, kind: input, shape index: {}]
  %s8 = inlined_call_operand.hbm [shape: bf16[64,512], index: 8, kind: input, shape index: {}]
  %s9 = inlined_call_operand.vmem [shape: bf16[256,64], index: 9, kind: input, shape index: {}]
  %s10 = inlined_call_operand.hbm [shape: f32[16,64], index: 10, kind: output, shape index: {}]
  %s11 = sld [smem:[#allocation0]]
  $region70: #{tpu_custom_call.1} parent=0
    _
  %s13 = ssub.s32 1, %s11
  %s14 = scalar_select 0, %s13, %s11
  $region1: #{tpu_custom_call.1} parent=0
    #allocation2 [shape = 'u8[8192]{0}', space=vmem, size = 0x2000, scoped, tag = 'input window, operand 0, single buffered']
    #allocation3 [shape = 's32[1]{0}', space=sflag, size = 0x4, scoped, tag = 'scoped memory for tpu_custom_call.1']
    #allocation4 [shape = 's32[1]{0}', space=sflag, size = 0x4, scoped, tag = 'scoped memory for tpu_custom_call.1']
    #allocation5 [shape = 'u8[16384]{0}', space=vmem, size = 0x4000, scoped, tag = 'input window, operand 3, single buffered']
    #allocation6 [shape = 's32[1]{0}', space=sflag, size = 0x4, scoped, tag = 'scoped memory for tpu_custom_call.1']
    #allocation7 [shape = 'u8[16384]{0}', space=vmem, size = 0x4000, scoped, tag = 'input window, operand 4, single buffered']
    #allocation8 [shape = 'u8[16384]{0}', space=vmem, size = 0x4000, scoped, tag = 'input window, operand 6, single buffered']
    #allocation9 [shape = 's32[1]{0}', space=sflag, size = 0x4, scoped, tag = 'scoped memory for tpu_custom_call.1']
    #allocation10 [shape = 'u8[65536]{0}', space=vmem, size = 0x10000, scoped, tag = 'input window, operand 8, single buffered']
    #allocation11 [shape = 'u8[8192]{0}', space=vmem, size = 0x2000, scoped, tag = 'output window, operand 0, single buffered']
    %15 = vsyncpa [#allocation3], 0
    %16 = vsyncpa [#allocation6], 0
    %17 = vsyncpa [#allocation9], 0
    %18 = vsyncpa [#allocation4], 0
    // Predicated region
    $region2: #{tpu_custom_call.1} parent=1 // pred_check
      _
    $region3: #{tpu_custom_call.1} parent=1 // pred_check_branch
      %20 = sbr.rel (0) target = $region5
    $region4: #{tpu_custom_call.1} parent=1 // pred_region
      %s22 = ssub.s32 256, 256
      %23 = vsyncadd [#allocation3], %s22
      %s24 = sshll.u32 [#allocation2], 4
      %s25 = int_to_ptr.vmem [resolvable:$true] %s24
      %30 = dma.hbm_to_vmem [thread:$0]  %s0, 256, %s25, [#allocation3], 128, 128, 8
    $region5: #{tpu_custom_call.1} parent=1 // pred_fallthru
      _
    // Predicated region
    $region6: #{tpu_custom_call.1} parent=1 // pred_check
      _
    $region7: #{tpu_custom_call.1} parent=1 // pred_check_branch
      %32 = sbr.rel (0) target = $region9
    $region8: #{tpu_custom_call.1} parent=1 // pred_region
      _
    $region9: #{tpu_custom_call.1} parent=1 // pred_fallthru
      _
    // Predicated region
    $region10: #{tpu_custom_call.1} parent=1 // pred_check
      _
    $region11: #{tpu_custom_call.1} parent=1 // pred_check_branch
      %34 = sbr.rel (0) target = $region13
    $region12: #{tpu_custom_call.1} parent=1 // pred_region
      _
    $region13: #{tpu_custom_call.1} parent=1 // pred_fallthru
      _
    // Predicated region
    $region14: #{tpu_custom_call.1} parent=1 // pred_check
      _
    $region15: #{tpu_custom_call.1} parent=1 // pred_check_branch
      %36 = sbr.rel (0) target = $region17
    $region16: #{tpu_custom_call.1} parent=1 // pred_region
      %s38 = ssub.s32 512, 512
      %39 = vsyncadd [#allocation6], %s38
      %s40 = sshll.u32 [#allocation5], 4
      %s41 = int_to_ptr.vmem [resolvable:$true] %s40
      %46 = dma.hbm_to_vmem [thread:$0]  %s3, 512, %s41, [#allocation6], 256, 256, 16
    $region17: #{tpu_custom_call.1} parent=1 // pred_fallthru
      _
    // Predicated region
    $region18: #{tpu_custom_call.1} parent=1 // pred_check
      _
    $region19: #{tpu_custom_call.1} parent=1 // pred_check_branch
      %48 = sbr.rel (0) target = $region21
    $region20: #{tpu_custom_call.1} parent=1 // pred_region
      %s50 = ssub.s32 512, 512
      %51 = vsyncadd [#allocation6], %s50
      %s52 = sshll.u32 [#allocation7], 4
      %s53 = int_to_ptr.vmem [resolvable:$true] %s52
      %58 = dma.hbm_to_vmem [thread:$0]  %s4, 512, %s53, [#allocation6], 256, 256, 16
    $region21: #{tpu_custom_call.1} parent=1 // pred_fallthru
      _
    // Predicated region
    $region22: #{tpu_custom_call.1} parent=1 // pred_check
      _
    $region23: #{tpu_custom_call.1} parent=1 // pred_check_branch
      %60 = sbr.rel (0) target = $region25
    $region24: #{tpu_custom_call.1} parent=1 // pred_region
      _
    $region25: #{tpu_custom_call.1} parent=1 // pred_fallthru
      _
    // Predicated region
    $region26: #{tpu_custom_call.1} parent=1 // pred_check
      _
    $region27: #{tpu_custom_call.1} parent=1 // pred_check_branch
      %62 = sbr.rel (0) target = $region29
    $region28: #{tpu_custom_call.1} parent=1 // pred_region
      %s64 = ssub.s32 512, 512
      %65 = vsyncadd [#allocation9], %s64
      %s66 = sshll.u32 [#allocation8], 4
      %s67 = int_to_ptr.vmem [resolvable:$true] %s66
      %72 = dma.hbm_to_vmem [thread:$0]  %s6, 512, %s67, [#allocation9], 64, 64, 4
    $region29: #{tpu_custom_call.1} parent=1 // pred_fallthru
      _
    // Predicated region
    $region30: #{tpu_custom_call.1} parent=1 // pred_check
      _
    $region31: #{tpu_custom_call.1} parent=1 // pred_check_branch
      %74 = sbr.rel (0) target = $region33
    $region32: #{tpu_custom_call.1} parent=1 // pred_region
      _
    $region33: #{tpu_custom_call.1} parent=1 // pred_fallthru
      _
    // Predicated region
    $region34: #{tpu_custom_call.1} parent=1 // pred_check
      _
    $region35: #{tpu_custom_call.1} parent=1 // pred_check_branch
      %76 = sbr.rel (0) target = $region37
    $region36: #{tpu_custom_call.1} parent=1 // pred_region
      %s78 = ssub.s32 2048, 2048
      %79 = vsyncadd [#allocation9], %s78
      %s80 = sshll.u32 [#allocation10], 4
      %s81 = int_to_ptr.vmem [resolvable:$true] %s80
      %86 = dma.hbm_to_vmem [thread:$0]  %s8, 2048, %s81, [#allocation9], 256, 256, 16
    $region37: #{tpu_custom_call.1} parent=1 // pred_fallthru
      _
    // Predicated region
    $region38: #{tpu_custom_call.1} parent=1 // pred_check
      _
    $region39: #{tpu_custom_call.1} parent=1 // pred_check_branch
      %88 = sbr.rel (0) target = $region41
    $region40: #{tpu_custom_call.1} parent=1 // pred_region
      _
    $region41: #{tpu_custom_call.1} parent=1 // pred_fallthru
      _
    // Predicated region
    $region42: #{tpu_custom_call.1} parent=1 // pred_check
      _
    $region43: #{tpu_custom_call.1} parent=1 // pred_check_branch
      %90 = sbr.rel (0) target = $region45
    $region44: #{tpu_custom_call.1} parent=1 // pred_region
      %91 = dma.done [#allocation3], 256
    $region45: #{tpu_custom_call.1} parent=1 // pred_fallthru
      _
    // Predicated region
    $region46: #{tpu_custom_call.1} parent=1 // pred_check
      _
    $region47: #{tpu_custom_call.1} parent=1 // pred_check_branch
      %93 = sbr.rel (0) target = $region49
    $region48: #{tpu_custom_call.1} parent=1 // pred_region
      %94 = dma.done [#allocation6], 512
    $region49: #{tpu_custom_call.1} parent=1 // pred_fallthru
      _
    // Predicated region
    $region50: #{tpu_custom_call.1} parent=1 // pred_check
      _
    $region51: #{tpu_custom_call.1} parent=1 // pred_check_branch
      %96 = sbr.rel (0) target = $region53
    $region52: #{tpu_custom_call.1} parent=1 // pred_region
      %97 = dma.done [#allocation6], 512
    $region53: #{tpu_custom_call.1} parent=1 // pred_fallthru
      _
    // Predicated region
    $region54: #{tpu_custom_call.1} parent=1 // pred_check
      _
    $region55: #{tpu_custom_call.1} parent=1 // pred_check_branch
      %99 = sbr.rel (0) target = $region57
    $region56: #{tpu_custom_call.1} parent=1 // pred_region
      %100 = dma.done [#allocation9], 512
    $region57: #{tpu_custom_call.1} parent=1 // pred_fallthru
      _
    // Predicated region
    $region58: #{tpu_custom_call.1} parent=1 // pred_check
      _
    $region59: #{tpu_custom_call.1} parent=1 // pred_check_branch
      %102 = sbr.rel (0) target = $region61
    $region60: #{tpu_custom_call.1} parent=1 // pred_region
      %103 = dma.done [#allocation9], 2048
    $region61: #{tpu_custom_call.1} parent=1 // pred_fallthru
      _
    %v105 = vld [vmem:[#allocation2] sm:$0xff]
    %v106 = vld [vmem:[#allocation2 + $0x8] sm:$0xff]
    %v107 = vmul.f32 %v105, %v105
    %v108 = vmul.f32 %v106, %v106
    %vm109 = vcmask 523264
    %v110 = vsel %vm109, %v107, 0.0
    %111 = vadd.xlane.f32.xlu0 %v110
    %v112 = vpop.xlane.xlu0 %111
    %v113 = vsel %vm109, %v108, 0.0
    %114 = vadd.xlane.f32.xlu0 %v113
    %v115 = vpop.xlane.xlu0 %114
    %v116 = vrcp.pop 64.0
    %v117 = vmul.f32 %v112, %v116
    %v118 = vmul.f32 %v115, %v116
    %v119 = vadd.f32 %v117, 1e-06
    %v120 = vadd.f32 %v118, 1e-06
    %v121 = vrsqrt.pop %v119
    %v122 = vrsqrt.pop %v120
    %v123 = vmul.f32 %v105, %v121
    %v124 = vmul.f32 %v106, %v122
    %v125 = vld [vmem:[%s1] sm:$0x1]
    %v127 = vlaneseq
    %v128 = vshrl.u32 %v127, 7
    %v129 = vsub.s32 0, %v128
    %v130 = vrot.slane %v125, %v129
    %v132 = vmul.f32 %v123, %v130
    %v133 = vmul.f32 %v124, %v130
    %v134 = vpack.c.bf16 %v133, %v132
    %v135 = vld [vmem:[%s2] sm:$0xff]
    %v136 = vld [vmem:[%s2 + $0x8] sm:$0xff]
    %v137 = vld [vmem:[%s2 + $0x10] sm:$0xff]
    %v138 = vld [vmem:[%s2 + $0x18] sm:$0xff]
    %v139 = vld [vmem:[%s2 + $0x20] sm:$0xff]
    %v140 = vld [vmem:[%s2 + $0x28] sm:$0xff]
    %v141 = vld [vmem:[%s2 + $0x30] sm:$0xff]
    %v142 = vld [vmem:[%s2 + $0x38] sm:$0xff]
    %v143 = vld [vmem:[%s2 + $0x40] sm:$0xff]
    %v144 = vld [vmem:[%s2 + $0x48] sm:$0xff]
    %v145 = vld [vmem:[%s2 + $0x50] sm:$0xff]
    %v146 = vld [vmem:[%s2 + $0x58] sm:$0xff]
    %v147 = vld [vmem:[%s2 + $0x60] sm:$0xff]
    %v148 = vld [vmem:[%s2 + $0x68] sm:$0xff]
    %v149 = vld [vmem:[%s2 + $0x70] sm:$0xff]
    %v150 = vld [vmem:[%s2 + $0x78] sm:$0xff]
    %v167 = vunpack.c.l.b16 %v135
    %v168 = vunpack.c.h.b16 %v135
    %v169 = vunpack.c.l.b16 %v136
    %v170 = vunpack.c.h.b16 %v136
    %v171 = vunpack.c.l.b16 %v137
    %v172 = vunpack.c.h.b16 %v137
    %v173 = vunpack.c.l.b16 %v138
    %v174 = vunpack.c.h.b16 %v138
    %v175 = vunpack.c.l.b16 %v139
    %v176 = vunpack.c.h.b16 %v139
    %v177 = vunpack.c.l.b16 %v140
    %v178 = vunpack.c.h.b16 %v140
    %v179 = vunpack.c.l.b16 %v141
    %v180 = vunpack.c.h.b16 %v141
    %v181 = vunpack.c.l.b16 %v142
    %v182 = vunpack.c.h.b16 %v142
    %v183 = vunpack.c.l.b16 %v143
    %v184 = vunpack.c.h.b16 %v143
    %v185 = vunpack.c.l.b16 %v144
    %v186 = vunpack.c.h.b16 %v144
    %v187 = vunpack.c.l.b16 %v145
    %v188 = vunpack.c.h.b16 %v145
    %v189 = vunpack.c.l.b16 %v146
    %v190 = vunpack.c.h.b16 %v146
    %v191 = vunpack.c.l.b16 %v147
    %v192 = vunpack.c.h.b16 %v147
    %v193 = vunpack.c.l.b16 %v148
    %v194 = vunpack.c.h.b16 %v148
    %v195 = vunpack.c.l.b16 %v149
    %v196 = vunpack.c.h.b16 %v149
    %v197 = vunpack.c.l.b16 %v150
    %v198 = vunpack.c.h.b16 %v150
    %v199 = vpack.c.b16 %v171, %v167
    %v200 = vpack.c.b16 %v172, %v168
    %v201 = vpack.c.b16 %v173, %v169
    %v202 = vpack.c.b16 %v174, %v170
    %v203 = vpack.c.b16 %v179, %v175
    %v204 = vpack.c.b16 %v180, %v176
    %v205 = vpack.c.b16 %v181, %v177
    %v206 = vpack.c.b16 %v182, %v178
    %v207 = vpack.c.b16 %v187, %v183
    %v208 = vpack.c.b16 %v188, %v184
    %v209 = vpack.c.b16 %v189, %v185
    %v210 = vpack.c.b16 %v190, %v186
    %v211 = vpack.c.b16 %v195, %v191
    %v212 = vpack.c.b16 %v196, %v192
    %v213 = vpack.c.b16 %v197, %v193
    %v214 = vpack.c.b16 %v198, %v194
    %v232 = vsel %vm109, %v134, 0
    %234 = vmatprep.subr.bf16.mxu0 %v200
    %235 = vmatpush1.bf16.msra.mxu0 %v199
    %236 = vmatprep.subr.bf16.mxu0 %v204
    %237 = vmatpush1.bf16.msra.mxu0 %v203
    %238 = vmatprep.subr.bf16.mxu0 %v208
    %239 = vmatpush1.bf16.msra.mxu0 %v207
    %240 = vmatprep.subr.bf16.mxu0 %v212
    %241 = vmatpush1.bf16.msra.mxu0 %v211
    %242 = vmatprep.subr.bf16.mxu0 0
    %243 = vmatpush1.bf16.msra.mxu0 0
    %244 = vmatprep.subr.bf16.mxu0 0
    %245 = vmatpush1.bf16.msra.mxu0 0
    %246 = vmatprep.subr.bf16.mxu0 0
    %247 = vmatpush1.bf16.msra.mxu0 0
    %248 = vmatprep.subr.bf16.mxu0 0
    %249 = vmatpush1.bf16.msra.mxu0 0
    %250 = vmatprep.subr.bf16.mxu0 0
    %251 = vmatpush1.bf16.msra.mxu0 0
    %252 = vmatprep.subr.bf16.mxu0 0
    %253 = vmatpush1.bf16.msra.mxu0 0
    %254 = vmatprep.subr.bf16.mxu0 0
    %255 = vmatpush1.bf16.msra.mxu0 0
    %256 = vmatprep.subr.bf16.mxu0 0
    %257 = vmatpush1.bf16.msra.mxu0 0
    %258 = vmatprep.subr.bf16.mxu0 0
    %259 = vmatpush1.bf16.msra.mxu0 0
    %260 = vmatprep.subr.bf16.mxu0 0
    %261 = vmatpush1.bf16.msra.mxu0 0
    %262 = vmatprep.subr.bf16.mxu0 0
    %263 = vmatpush1.bf16.msra.mxu0 0
    %264 = vmatprep.subr.bf16.mxu0 0
    %265 = vmatpush1.bf16.msra.mxu0 0
    %266 = vmatprep.mubr.bf16.mxu0 0
    %267 = vmatmul.mubr.bf16.gmra.mrb[0].mxu0 %v232
    %v268 = vpop.f32.mrb[0].mxu0
    %v269 = vadd.f32 0.0, %v268
    %v270 = vpop.f32.mrb[0].mxu0
    %v271 = vadd.f32 0.0, %v270
    %v272 = vpop.f32.mrb[0].mxu0
    %v273 = vadd.f32 0.0, %v272
    %v274 = vpop.f32.mrb[0].mxu0
    %v275 = vadd.f32 0.0, %v274
    %276 = vdwg.mxu0
    %277 = vmatprep.subr.bf16.mxu0 %v202
    %278 = vmatpush1.bf16.msra.mxu0 %v201
    %279 = vmatprep.subr.bf16.mxu0 %v206
    %280 = vmatpush1.bf16.msra.mxu0 %v205
    %281 = vmatprep.subr.bf16.mxu0 %v210
    %282 = vmatpush1.bf16.msra.mxu0 %v209
    %283 = vmatprep.subr.bf16.mxu0 %v214
    %284 = vmatpush1.bf16.msra.mxu0 %v213
    %285 = vmatprep.subr.bf16.mxu0 0
    %286 = vmatpush1.bf16.msra.mxu0 0
    %287 = vmatprep.subr.bf16.mxu0 0
    %288 = vmatpush1.bf16.msra.mxu0 0
    %289 = vmatprep.subr.bf16.mxu0 0
    %290 = vmatpush1.bf16.msra.mxu0 0
    %291 = vmatprep.subr.bf16.mxu0 0
    %292 = vmatpush1.bf16.msra.mxu0 0
    %293 = vmatprep.subr.bf16.mxu0 0
    %294 = vmatpush1.bf16.msra.mxu0 0
    %295 = vmatprep.subr.bf16.mxu0 0
    %296 = vmatpush1.bf16.msra.mxu0 0
    %297 = vmatprep.subr.bf16.mxu0 0
    %298 = vmatpush1.bf16.msra.mxu0 0
    %299 = vmatprep.subr.bf16.mxu0 0
    %300 = vmatpush1.bf16.msra.mxu0 0
    %301 = vmatprep.subr.bf16.mxu0 0
    %302 = vmatpush1.bf16.msra.mxu0 0
    %303 = vmatprep.subr.bf16.mxu0 0
    %304 = vmatpush1.bf16.msra.mxu0 0
    %305 = vmatprep.subr.bf16.mxu0 0
    %306 = vmatpush1.bf16.msra.mxu0 0
    %307 = vmatprep.subr.bf16.mxu0 0
    %308 = vmatpush1.bf16.msra.mxu0 0
    %309 = vmatprep.mubr.bf16.mxu0 0
    %310 = vmatmul.mubr.bf16.gmra.mrb[0].mxu0 %v232
    %v311 = vpop.f32.mrb[0].mxu0
    %v312 = vadd.f32 0.0, %v311
    %v313 = vpop.f32.mrb[0].mxu0
    %v314 = vadd.f32 0.0, %v313
    %v315 = vpop.f32.mrb[0].mxu0
    %v316 = vadd.f32 0.0, %v315
    %v317 = vpop.f32.mrb[0].mxu0
    %v318 = vadd.f32 0.0, %v317
    %319 = vdwg.mxu0
    %v320 = vld [vmem:[#allocation5] sm:$0xff]
    %v321 = vld [vmem:[#allocation5 + $0x8] sm:$0xff]
    %v322 = vld [vmem:[#allocation5 + $0x10] sm:$0xff]
    %v323 = vld [vmem:[#allocation5 + $0x18] sm:$0xff]
    %v324 = vmul.f32 %v269, %v320
    %v325 = vmul.f32 %v271, %v321
    %v326 = vmul.f32 %v273, %v322
    %v327 = vmul.f32 %v275, %v323
    %v328 = vld [vmem:[#allocation7] sm:$0xff]
    %v329 = vld [vmem:[#allocation7 + $0x8] sm:$0xff]
    %v330 = vld [vmem:[#allocation7 + $0x10] sm:$0xff]
    %v331 = vld [vmem:[#allocation7 + $0x18] sm:$0xff]
    %v332 = vmul.f32 %v312, %v328
    %v333 = vmul.f32 %v314, %v329
    %v334 = vmul.f32 %v316, %v330
    %v335 = vmul.f32 %v318, %v331
    %v336 = vadd.f32 %v324, %v332
    %v337 = vadd.f32 %v325, %v333
    %v338 = vadd.f32 %v326, %v334
    %v339 = vadd.f32 %v327, %v335
    %340 = vxpose.xlu0.b32.start [1/16] %v336, 128
    %341 = vxpose.xlu0.b32.cont [2/16] %v338, 128
    %342 = vxpose.xlu0.b32.cont [3/16] 0.0, 128
    %343 = vxpose.xlu0.b32.cont [4/16] 0.0, 128
    %344 = vxpose.xlu0.b32.cont [5/16] 0.0, 128
    %345 = vxpose.xlu0.b32.cont [6/16] 0.0, 128
    %346 = vxpose.xlu0.b32.cont [7/16] 0.0, 128
    %347 = vxpose.xlu0.b32.cont [8/16] 0.0, 128
    %348 = vxpose.xlu0.b32.cont [9/16] 0.0, 128
    %349 = vxpose.xlu0.b32.cont [10/16] 0.0, 128
    %350 = vxpose.xlu0.b32.cont [11/16] 0.0, 128
    %351 = vxpose.xlu0.b32.cont [12/16] 0.0, 128
    %352 = vxpose.xlu0.b32.cont [13/16] 0.0, 128
    %353 = vxpose.xlu0.b32.cont [14/16] 0.0, 128
    %354 = vxpose.xlu0.b32.cont [15/16] 0.0, 128
    %355 = vxpose.xlu0.b32.end [16/16] 0.0, 128
    %v356 = vpop.trf.xlu0
    %v357 = vpop.trf.xlu0
    %v358 = vpop.trf.xlu0
    %v359 = vpop.trf.xlu0
    %v360 = vpop.trf.xlu0
    %v361 = vpop.trf.xlu0
    %v362 = vpop.trf.xlu0
    %v363 = vpop.trf.xlu0
    %v364 = vpop.trf.xlu0
    %v365 = vpop.trf.xlu0
    %v366 = vpop.trf.xlu0
    %v367 = vpop.trf.xlu0
    %v368 = vpop.trf.xlu0
    %v369 = vpop.trf.xlu0
    %v370 = vpop.trf.xlu0
    %v371 = vpop.trf.xlu0
    %372 = vxpose.xlu0.b32.start [1/16] %v337, 128
    %373 = vxpose.xlu0.b32.cont [2/16] %v339, 128
    %374 = vxpose.xlu0.b32.cont [3/16] 0.0, 128
    %375 = vxpose.xlu0.b32.cont [4/16] 0.0, 128
    %376 = vxpose.xlu0.b32.cont [5/16] 0.0, 128
    %377 = vxpose.xlu0.b32.cont [6/16] 0.0, 128
    %378 = vxpose.xlu0.b32.cont [7/16] 0.0, 128
    %379 = vxpose.xlu0.b32.cont [8/16] 0.0, 128
    %380 = vxpose.xlu0.b32.cont [9/16] 0.0, 128
    %381 = vxpose.xlu0.b32.cont [10/16] 0.0, 128
    %382 = vxpose.xlu0.b32.cont [11/16] 0.0, 128
    %383 = vxpose.xlu0.b32.cont [12/16] 0.0, 128
    %384 = vxpose.xlu0.b32.cont [13/16] 0.0, 128
    %385 = vxpose.xlu0.b32.cont [14/16] 0.0, 128
    %386 = vxpose.xlu0.b32.cont [15/16] 0.0, 128
    %387 = vxpose.xlu0.b32.end [16/16] 0.0, 128
    %v388 = vpop.trf.xlu0
    %v389 = vpop.trf.xlu0
    %v390 = vpop.trf.xlu0
    %v391 = vpop.trf.xlu0
    %v392 = vpop.trf.xlu0
    %v393 = vpop.trf.xlu0
    %v394 = vpop.trf.xlu0
    %v395 = vpop.trf.xlu0
    %v396 = vpop.trf.xlu0
    %v397 = vpop.trf.xlu0
    %v398 = vpop.trf.xlu0
    %v399 = vpop.trf.xlu0
    %v400 = vpop.trf.xlu0
    %v401 = vpop.trf.xlu0
    %v402 = vpop.trf.xlu0
    %v403 = vpop.trf.xlu0
    %404 = vxpose.xlu0.b32.start [1/16] %v356, 128
    %405 = vxpose.xlu0.b32.cont [2/16] %v357, 128
    %406 = vxpose.xlu0.b32.cont [3/16] 0.0, 128
    %407 = vxpose.xlu0.b32.cont [4/16] 0.0, 128
    %408 = vxpose.xlu0.b32.cont [5/16] 0.0, 128
    %409 = vxpose.xlu0.b32.cont [6/16] 0.0, 128
    %410 = vxpose.xlu0.b32.cont [7/16] 0.0, 128
    %411 = vxpose.xlu0.b32.cont [8/16] 0.0, 128
    %412 = vxpose.xlu0.b32.cont [9/16] 0.0, 128
    %413 = vxpose.xlu0.b32.cont [10/16] 0.0, 128
    %414 = vxpose.xlu0.b32.cont [11/16] 0.0, 128
    %415 = vxpose.xlu0.b32.cont [12/16] 0.0, 128
    %416 = vxpose.xlu0.b32.cont [13/16] 0.0, 128
    %417 = vxpose.xlu0.b32.cont [14/16] 0.0, 128
    %418 = vxpose.xlu0.b32.cont [15/16] 0.0, 128
    %419 = vxpose.xlu0.b32.end [16/16] 0.0, 128
    %v420 = vpop.trf.xlu0
    %v421 = vpop.trf.xlu0
    %v422 = vpop.trf.xlu0
    %v423 = vpop.trf.xlu0
    %v424 = vpop.trf.xlu0
    %v425 = vpop.trf.xlu0
    %v426 = vpop.trf.xlu0
    %v427 = vpop.trf.xlu0
    %v428 = vpop.trf.xlu0
    %v429 = vpop.trf.xlu0
    %v430 = vpop.trf.xlu0
    %v431 = vpop.trf.xlu0
    %v432 = vpop.trf.xlu0
    %v433 = vpop.trf.xlu0
    %v434 = vpop.trf.xlu0
    %v435 = vpop.trf.xlu0
    %436 = vxpose.xlu0.b32.start [1/16] %v358, 128
    %437 = vxpose.xlu0.b32.cont [2/16] %v359, 128
    %438 = vxpose.xlu0.b32.cont [3/16] 0.0, 128
    %439 = vxpose.xlu0.b32.cont [4/16] 0.0, 128
    %440 = vxpose.xlu0.b32.cont [5/16] 0.0, 128
    %441 = vxpose.xlu0.b32.cont [6/16] 0.0, 128
    %442 = vxpose.xlu0.b32.cont [7/16] 0.0, 128
    %443 = vxpose.xlu0.b32.cont [8/16] 0.0, 128
    %444 = vxpose.xlu0.b32.cont [9/16] 0.0, 128
    %445 = vxpose.xlu0.b32.cont [10/16] 0.0, 128
    %446 = vxpose.xlu0.b32.cont [11/16] 0.0, 128
    %447 = vxpose.xlu0.b32.cont [12/16] 0.0, 128
    %448 = vxpose.xlu0.b32.cont [13/16] 0.0, 128
    %449 = vxpose.xlu0.b32.cont [14/16] 0.0, 128
    %450 = vxpose.xlu0.b32.cont [15/16] 0.0, 128
    %451 = vxpose.xlu0.b32.end [16/16] 0.0, 128
    %v452 = vpop.trf.xlu0
    %v453 = vpop.trf.xlu0
    %v454 = vpop.trf.xlu0
    %v455 = vpop.trf.xlu0
    %v456 = vpop.trf.xlu0
    %v457 = vpop.trf.xlu0
    %v458 = vpop.trf.xlu0
    %v459 = vpop.trf.xlu0
    %v460 = vpop.trf.xlu0
    %v461 = vpop.trf.xlu0
    %v462 = vpop.trf.xlu0
    %v463 = vpop.trf.xlu0
    %v464 = vpop.trf.xlu0
    %v465 = vpop.trf.xlu0
    %v466 = vpop.trf.xlu0
    %v467 = vpop.trf.xlu0
    %468 = vxpose.xlu0.b32.start [1/16] %v360, 128
    %469 = vxpose.xlu0.b32.cont [2/16] %v361, 128
    %470 = vxpose.xlu0.b32.cont [3/16] 0.0, 128
    %471 = vxpose.xlu0.b32.cont [4/16] 0.0, 128
    %472 = vxpose.xlu0.b32.cont [5/16] 0.0, 128
    %473 = vxpose.xlu0.b32.cont [6/16] 0.0, 128
    %474 = vxpose.xlu0.b32.cont [7/16] 0.0, 128
    %475 = vxpose.xlu0.b32.cont [8/16] 0.0, 128
    %476 = vxpose.xlu0.b32.cont [9/16] 0.0, 128
    %477 = vxpose.xlu0.b32.cont [10/16] 0.0, 128
    %478 = vxpose.xlu0.b32.cont [11/16] 0.0, 128
    %479 = vxpose.xlu0.b32.cont [12/16] 0.0, 128
    %480 = vxpose.xlu0.b32.cont [13/16] 0.0, 128
    %481 = vxpose.xlu0.b32.cont [14/16] 0.0, 128
    %482 = vxpose.xlu0.b32.cont [15/16] 0.0, 128
    %483 = vxpose.xlu0.b32.end [16/16] 0.0, 128
    %v484 = vpop.trf.xlu0
    %v485 = vpop.trf.xlu0
    %v486 = vpop.trf.xlu0
    %v487 = vpop.trf.xlu0
    %v488 = vpop.trf.xlu0
    %v489 = vpop.trf.xlu0
    %v490 = vpop.trf.xlu0
    %v491 = vpop.trf.xlu0
    %v492 = vpop.trf.xlu0
    %v493 = vpop.trf.xlu0
    %v494 = vpop.trf.xlu0
    %v495 = vpop.trf.xlu0
    %v496 = vpop.trf.xlu0
    %v497 = vpop.trf.xlu0
    %v498 = vpop.trf.xlu0
    %v499 = vpop.trf.xlu0
    %500 = vxpose.xlu0.b32.start [1/16] %v362, 128
    %501 = vxpose.xlu0.b32.cont [2/16] %v363, 128
    %502 = vxpose.xlu0.b32.cont [3/16] 0.0, 128
    %503 = vxpose.xlu0.b32.cont [4/16] 0.0, 128
    %504 = vxpose.xlu0.b32.cont [5/16] 0.0, 128
    %505 = vxpose.xlu0.b32.cont [6/16] 0.0, 128
    %506 = vxpose.xlu0.b32.cont [7/16] 0.0, 128
    %507 = vxpose.xlu0.b32.cont [8/16] 0.0, 128
    %508 = vxpose.xlu0.b32.cont [9/16] 0.0, 128
    %509 = vxpose.xlu0.b32.cont [10/16] 0.0, 128
    %510 = vxpose.xlu0.b32.cont [11/16] 0.0, 128
    %511 = vxpose.xlu0.b32.cont [12/16] 0.0, 128
    %512 = vxpose.xlu0.b32.cont [13/16] 0.0, 128
    %513 = vxpose.xlu0.b32.cont [14/16] 0.0, 128
    %514 = vxpose.xlu0.b32.cont [15/16] 0.0, 128
    %515 = vxpose.xlu0.b32.end [16/16] 0.0, 128
    %v516 = vpop.trf.xlu0
    %v517 = vpop.trf.xlu0
    %v518 = vpop.trf.xlu0
    %v519 = vpop.trf.xlu0
    %v520 = vpop.trf.xlu0
    %v521 = vpop.trf.xlu0
    %v522 = vpop.trf.xlu0
    %v523 = vpop.trf.xlu0
    %v524 = vpop.trf.xlu0
    %v525 = vpop.trf.xlu0
    %v526 = vpop.trf.xlu0
    %v527 = vpop.trf.xlu0
    %v528 = vpop.trf.xlu0
    %v529 = vpop.trf.xlu0
    %v530 = vpop.trf.xlu0
    %v531 = vpop.trf.xlu0
    %532 = vxpose.xlu0.b32.start [1/16] %v364, 128
    %533 = vxpose.xlu0.b32.cont [2/16] %v365, 128
    %534 = vxpose.xlu0.b32.cont [3/16] 0.0, 128
    %535 = vxpose.xlu0.b32.cont [4/16] 0.0, 128
    %536 = vxpose.xlu0.b32.cont [5/16] 0.0, 128
    %537 = vxpose.xlu0.b32.cont [6/16] 0.0, 128
    %538 = vxpose.xlu0.b32.cont [7/16] 0.0, 128
    %539 = vxpose.xlu0.b32.cont [8/16] 0.0, 128
    %540 = vxpose.xlu0.b32.cont [9/16] 0.0, 128
    %541 = vxpose.xlu0.b32.cont [10/16] 0.0, 128
    %542 = vxpose.xlu0.b32.cont [11/16] 0.0, 128
    %543 = vxpose.xlu0.b32.cont [12/16] 0.0, 128
    %544 = vxpose.xlu0.b32.cont [13/16] 0.0, 128
    %545 = vxpose.xlu0.b32.cont [14/16] 0.0, 128
    %546 = vxpose.xlu0.b32.cont [15/16] 0.0, 128
    %547 = vxpose.xlu0.b32.end [16/16] 0.0, 128
    %v548 = vpop.trf.xlu0
    %v549 = vpop.trf.xlu0
    %v550 = vpop.trf.xlu0
    %v551 = vpop.trf.xlu0
    %v552 = vpop.trf.xlu0
    %v553 = vpop.trf.xlu0
    %v554 = vpop.trf.xlu0
    %v555 = vpop.trf.xlu0
    %v556 = vpop.trf.xlu0
    %v557 = vpop.trf.xlu0
    %v558 = vpop.trf.xlu0
    %v559 = vpop.trf.xlu0
    %v560 = vpop.trf.xlu0
    %v561 = vpop.trf.xlu0
    %v562 = vpop.trf.xlu0
    %v563 = vpop.trf.xlu0
    %564 = vxpose.xlu0.b32.start [1/16] %v366, 128
    %565 = vxpose.xlu0.b32.cont [2/16] %v367, 128
    %566 = vxpose.xlu0.b32.cont [3/16] 0.0, 128
    %567 = vxpose.xlu0.b32.cont [4/16] 0.0, 128
    %568 = vxpose.xlu0.b32.cont [5/16] 0.0, 128
    %569 = vxpose.xlu0.b32.cont [6/16] 0.0, 128
    %570 = vxpose.xlu0.b32.cont [7/16] 0.0, 128
    %571 = vxpose.xlu0.b32.cont [8/16] 0.0, 128
    %572 = vxpose.xlu0.b32.cont [9/16] 0.0, 128
    %573 = vxpose.xlu0.b32.cont [10/16] 0.0, 128
    %574 = vxpose.xlu0.b32.cont [11/16] 0.0, 128
    %575 = vxpose.xlu0.b32.cont [12/16] 0.0, 128
    %576 = vxpose.xlu0.b32.cont [13/16] 0.0, 128
    %577 = vxpose.xlu0.b32.cont [14/16] 0.0, 128
    %578 = vxpose.xlu0.b32.cont [15/16] 0.0, 128
    %579 = vxpose.xlu0.b32.end [16/16] 0.0, 128
    %v580 = vpop.trf.xlu0
    %v581 = vpop.trf.xlu0
    %v582 = vpop.trf.xlu0
    %v583 = vpop.trf.xlu0
    %v584 = vpop.trf.xlu0
    %v585 = vpop.trf.xlu0
    %v586 = vpop.trf.xlu0
    %v587 = vpop.trf.xlu0
    %v588 = vpop.trf.xlu0
    %v589 = vpop.trf.xlu0
    %v590 = vpop.trf.xlu0
    %v591 = vpop.trf.xlu0
    %v592 = vpop.trf.xlu0
    %v593 = vpop.trf.xlu0
    %v594 = vpop.trf.xlu0
    %v595 = vpop.trf.xlu0
    %596 = vxpose.xlu0.b32.start [1/16] %v368, 128
    %597 = vxpose.xlu0.b32.cont [2/16] %v369, 128
    %598 = vxpose.xlu0.b32.cont [3/16] 0.0, 128
    %599 = vxpose.xlu0.b32.cont [4/16] 0.0, 128
    %600 = vxpose.xlu0.b32.cont [5/16] 0.0, 128
    %601 = vxpose.xlu0.b32.cont [6/16] 0.0, 128
    %602 = vxpose.xlu0.b32.cont [7/16] 0.0, 128
    %603 = vxpose.xlu0.b32.cont [8/16] 0.0, 128
    %604 = vxpose.xlu0.b32.cont [9/16] 0.0, 128
    %605 = vxpose.xlu0.b32.cont [10/16] 0.0, 128
    %606 = vxpose.xlu0.b32.cont [11/16] 0.0, 128
    %607 = vxpose.xlu0.b32.cont [12/16] 0.0, 128
    %608 = vxpose.xlu0.b32.cont [13/16] 0.0, 128
    %609 = vxpose.xlu0.b32.cont [14/16] 0.0, 128
    %610 = vxpose.xlu0.b32.cont [15/16] 0.0, 128
    %611 = vxpose.xlu0.b32.end [16/16] 0.0, 128
    %v612 = vpop.trf.xlu0
    %v613 = vpop.trf.xlu0
    %v614 = vpop.trf.xlu0
    %v615 = vpop.trf.xlu0
    %v616 = vpop.trf.xlu0
    %v617 = vpop.trf.xlu0
    %v618 = vpop.trf.xlu0
    %v619 = vpop.trf.xlu0
    %v620 = vpop.trf.xlu0
    %v621 = vpop.trf.xlu0
    %v622 = vpop.trf.xlu0
    %v623 = vpop.trf.xlu0
    %v624 = vpop.trf.xlu0
    %v625 = vpop.trf.xlu0
    %v626 = vpop.trf.xlu0
    %v627 = vpop.trf.xlu0
    %628 = vxpose.xlu0.b32.start [1/16] %v370, 128
    %629 = vxpose.xlu0.b32.cont [2/16] %v371, 128
    %630 = vxpose.xlu0.b32.cont [3/16] 0.0, 128
    %631 = vxpose.xlu0.b32.cont [4/16] 0.0, 128
    %632 = vxpose.xlu0.b32.cont [5/16] 0.0, 128
    %633 = vxpose.xlu0.b32.cont [6/16] 0.0, 128
    %634 = vxpose.xlu0.b32.cont [7/16] 0.0, 128
    %635 = vxpose.xlu0.b32.cont [8/16] 0.0, 128
    %636 = vxpose.xlu0.b32.cont [9/16] 0.0, 128
    %637 = vxpose.xlu0.b32.cont [10/16] 0.0, 128
    %638 = vxpose.xlu0.b32.cont [11/16] 0.0, 128
    %639 = vxpose.xlu0.b32.cont [12/16] 0.0, 128
    %640 = vxpose.xlu0.b32.cont [13/16] 0.0, 128
    %641 = vxpose.xlu0.b32.cont [14/16] 0.0, 128
    %642 = vxpose.xlu0.b32.cont [15/16] 0.0, 128
    %643 = vxpose.xlu0.b32.end [16/16] 0.0, 128
    %v644 = vpop.trf.xlu0
    %v645 = vpop.trf.xlu0
    %v646 = vpop.trf.xlu0
    %v647 = vpop.trf.xlu0
    %v648 = vpop.trf.xlu0
    %v649 = vpop.trf.xlu0
    %v650 = vpop.trf.xlu0
    %v651 = vpop.trf.xlu0
    %v652 = vpop.trf.xlu0
    %v653 = vpop.trf.xlu0
    %v654 = vpop.trf.xlu0
    %v655 = vpop.trf.xlu0
    %v656 = vpop.trf.xlu0
    %v657 = vpop.trf.xlu0
    %v658 = vpop.trf.xlu0
    %v659 = vpop.trf.xlu0
    %660 = vxpose.xlu0.b32.start [1/16] %v388, 128
    %661 = vxpose.xlu0.b32.cont [2/16] %v389, 128
    %662 = vxpose.xlu0.b32.cont [3/16] 0.0, 128
    %663 = vxpose.xlu0.b32.cont [4/16] 0.0, 128
    %664 = vxpose.xlu0.b32.cont [5/16] 0.0, 128
    %665 = vxpose.xlu0.b32.cont [6/16] 0.0, 128
    %666 = vxpose.xlu0.b32.cont [7/16] 0.0, 128
    %667 = vxpose.xlu0.b32.cont [8/16] 0.0, 128
    %668 = vxpose.xlu0.b32.cont [9/16] 0.0, 128
    %669 = vxpose.xlu0.b32.cont [10/16] 0.0, 128
    %670 = vxpose.xlu0.b32.cont [11/16] 0.0, 128
    %671 = vxpose.xlu0.b32.cont [12/16] 0.0, 128
    %672 = vxpose.xlu0.b32.cont [13/16] 0.0, 128
    %673 = vxpose.xlu0.b32.cont [14/16] 0.0, 128
    %674 = vxpose.xlu0.b32.cont [15/16] 0.0, 128
    %675 = vxpose.xlu0.b32.end [16/16] 0.0, 128
    %v676 = vpop.trf.xlu0
    %v677 = vpop.trf.xlu0
    %v678 = vpop.trf.xlu0
    %v679 = vpop.trf.xlu0
    %v680 = vpop.trf.xlu0
    %v681 = vpop.trf.xlu0
    %v682 = vpop.trf.xlu0
    %v683 = vpop.trf.xlu0
    %v684 = vpop.trf.xlu0
    %v685 = vpop.trf.xlu0
    %v686 = vpop.trf.xlu0
    %v687 = vpop.trf.xlu0
    %v688 = vpop.trf.xlu0
    %v689 = vpop.trf.xlu0
    %v690 = vpop.trf.xlu0
    %v691 = vpop.trf.xlu0
    %692 = vxpose.xlu0.b32.start [1/16] %v390, 128
    %693 = vxpose.xlu0.b32.cont [2/16] %v391, 128
    %694 = vxpose.xlu0.b32.cont [3/16] 0.0, 128
    %695 = vxpose.xlu0.b32.cont [4/16] 0.0, 128
    %696 = vxpose.xlu0.b32.cont [5/16] 0.0, 128
    %697 = vxpose.xlu0.b32.cont [6/16] 0.0, 128
    %698 = vxpose.xlu0.b32.cont [7/16] 0.0, 128
    %699 = vxpose.xlu0.b32.cont [8/16] 0.0, 128
    %700 = vxpose.xlu0.b32.cont [9/16] 0.0, 128
    %701 = vxpose.xlu0.b32.cont [10/16] 0.0, 128
    %702 = vxpose.xlu0.b32.cont [11/16] 0.0, 128
    %703 = vxpose.xlu0.b32.cont [12/16] 0.0, 128
    %704 = vxpose.xlu0.b32.cont [13/16] 0.0, 128
    %705 = vxpose.xlu0.b32.cont [14/16] 0.0, 128
    %706 = vxpose.xlu0.b32.cont [15/16] 0.0, 128
    %707 = vxpose.xlu0.b32.end [16/16] 0.0, 128
    %v708 = vpop.trf.xlu0
    %v709 = vpop.trf.xlu0
    %v710 = vpop.trf.xlu0
    %v711 = vpop.trf.xlu0
    %v712 = vpop.trf.xlu0
    %v713 = vpop.trf.xlu0
    %v714 = vpop.trf.xlu0
    %v715 = vpop.trf.xlu0
    %v716 = vpop.trf.xlu0
    %v717 = vpop.trf.xlu0
    %v718 = vpop.trf.xlu0
    %v719 = vpop.trf.xlu0
    %v720 = vpop.trf.xlu0
    %v721 = vpop.trf.xlu0
    %v722 = vpop.trf.xlu0
    %v723 = vpop.trf.xlu0
    %724 = vxpose.xlu0.b32.start [1/16] %v392, 128
    %725 = vxpose.xlu0.b32.cont [2/16] %v393, 128
    %726 = vxpose.xlu0.b32.cont [3/16] 0.0, 128
    %727 = vxpose.xlu0.b32.cont [4/16] 0.0, 128
    %728 = vxpose.xlu0.b32.cont [5/16] 0.0, 128
    %729 = vxpose.xlu0.b32.cont [6/16] 0.0, 128
    %730 = vxpose.xlu0.b32.cont [7/16] 0.0, 128
    %731 = vxpose.xlu0.b32.cont [8/16] 0.0, 128
    %732 = vxpose.xlu0.b32.cont [9/16] 0.0, 128
    %733 = vxpose.xlu0.b32.cont [10/16] 0.0, 128
    %734 = vxpose.xlu0.b32.cont [11/16] 0.0, 128
    %735 = vxpose.xlu0.b32.cont [12/16] 0.0, 128
    %736 = vxpose.xlu0.b32.cont [13/16] 0.0, 128
    %737 = vxpose.xlu0.b32.cont [14/16] 0.0, 128
    %738 = vxpose.xlu0.b32.cont [15/16] 0.0, 128
    %739 = vxpose.xlu0.b32.end [16/16] 0.0, 128
    %v740 = vpop.trf.xlu0
    %v741 = vpop.trf.xlu0
    %v742 = vpop.trf.xlu0
    %v743 = vpop.trf.xlu0
    %v744 = vpop.trf.xlu0
    %v745 = vpop.trf.xlu0
    %v746 = vpop.trf.xlu0
    %v747 = vpop.trf.xlu0
    %v748 = vpop.trf.xlu0
    %v749 = vpop.trf.xlu0
    %v750 = vpop.trf.xlu0
    %v751 = vpop.trf.xlu0
    %v752 = vpop.trf.xlu0
    %v753 = vpop.trf.xlu0
    %v754 = vpop.trf.xlu0
    %v755 = vpop.trf.xlu0
    %756 = vxpose.xlu0.b32.start [1/16] %v394, 128
    %757 = vxpose.xlu0.b32.cont [2/16] %v395, 128
    %758 = vxpose.xlu0.b32.cont [3/16] 0.0, 128
    %759 = vxpose.xlu0.b32.cont [4/16] 0.0, 128
    %760 = vxpose.xlu0.b32.cont [5/16] 0.0, 128
    %761 = vxpose.xlu0.b32.cont [6/16] 0.0, 128
    %762 = vxpose.xlu0.b32.cont [7/16] 0.0, 128
    %763 = vxpose.xlu0.b32.cont [8/16] 0.0, 128
    %764 = vxpose.xlu0.b32.cont [9/16] 0.0, 128
    %765 = vxpose.xlu0.b32.cont [10/16] 0.0, 128
    %766 = vxpose.xlu0.b32.cont [11/16] 0.0, 128
    %767 = vxpose.xlu0.b32.cont [12/16] 0.0, 128
    %768 = vxpose.xlu0.b32.cont [13/16] 0.0, 128
    %769 = vxpose.xlu0.b32.cont [14/16] 0.0, 128
    %770 = vxpose.xlu0.b32.cont [15/16] 0.0, 128
    %771 = vxpose.xlu0.b32.end [16/16] 0.0, 128
    %v772 = vpop.trf.xlu0
    %v773 = vpop.trf.xlu0
    %v774 = vpop.trf.xlu0
    %v775 = vpop.trf.xlu0
    %v776 = vpop.trf.xlu0
    %v777 = vpop.trf.xlu0
    %v778 = vpop.trf.xlu0
    %v779 = vpop.trf.xlu0
    %v780 = vpop.trf.xlu0
    %v781 = vpop.trf.xlu0
    %v782 = vpop.trf.xlu0
    %v783 = vpop.trf.xlu0
    %v784 = vpop.trf.xlu0
    %v785 = vpop.trf.xlu0
    %v786 = vpop.trf.xlu0
    %v787 = vpop.trf.xlu0
    %v788 = vpack.c.bf16 %v421, %v420
    %v789 = vpack.c.bf16 %v453, %v452
    %v790 = vpack.c.bf16 %v485, %v484
    %v791 = vpack.c.bf16 %v517, %v516
    %v792 = vpack.c.bf16 %v549, %v548
    %v793 = vpack.c.bf16 %v581, %v580
    %v794 = vpack.c.bf16 %v613, %v612
    %v795 = vpack.c.bf16 %v645, %v644
    %v796 = vpack.c.bf16 %v677, %v676
    %v797 = vpack.c.bf16 %v709, %v708
    %v798 = vpack.c.bf16 %v741, %v740
    %v799 = vpack.c.bf16 %v773, %v772
    %v800 = vld [vmem:[%s5] sm:$0xff]
    %v801 = vld [vmem:[%s5 + $0x8] sm:$0xff]
    %v802 = vld [vmem:[%s5 + $0x10] sm:$0xff]
    %v803 = vld [vmem:[%s5 + $0x18] sm:$0xff]
    %v804 = vld [vmem:[%s5 + $0x20] sm:$0xff]
    %v805 = vld [vmem:[%s5 + $0x28] sm:$0xff]
    %v806 = vld [vmem:[%s5 + $0x30] sm:$0xff]
    %v807 = vld [vmem:[%s5 + $0x38] sm:$0xff]
    %vm808 = vcmask 130048
    %v810 = vsel %vm808, %v788, 0
    %v813 = vsel %vm808, %v789, 0
    %v816 = vsel %vm808, %v790, 0
    %v819 = vsel %vm808, %v791, 0
    %v822 = vsel %vm808, %v792, 0
    %v825 = vsel %vm808, %v793, 0
    %v828 = vsel %vm808, %v794, 0
    %v831 = vsel %vm808, %v795, 0
    %833 = vmatprep.subr.bf16.mxu0 0
    %834 = vmatpush1.bf16.xpose.msra.mxu0 %v822
    %835 = vmatprep.subr.bf16.mxu0 0
    %836 = vmatpush1.bf16.xpose.msra.mxu0 %v825
    %837 = vmatprep.subr.bf16.mxu0 0
    %838 = vmatpush1.bf16.xpose.msra.mxu0 %v828
    %839 = vmatprep.subr.bf16.mxu0 0
    %840 = vmatpush1.bf16.xpose.msra.mxu0 %v831
    %841 = vmatprep.subr.bf16.mxu0 0
    %842 = vmatpush1.bf16.xpose.msra.mxu0 0
    %843 = vmatprep.subr.bf16.mxu0 0
    %844 = vmatpush1.bf16.xpose.msra.mxu0 0
    %845 = vmatprep.subr.bf16.mxu0 0
    %846 = vmatpush1.bf16.xpose.msra.mxu0 0
    %847 = vmatprep.subr.bf16.mxu0 0
    %848 = vmatpush1.bf16.xpose.msra.mxu0 0
    %849 = vmatprep.subr.bf16.mxu0 0
    %850 = vmatpush1.bf16.xpose.msra.mxu0 0
    %851 = vmatprep.subr.bf16.mxu0 0
    %852 = vmatpush1.bf16.xpose.msra.mxu0 0
    %853 = vmatprep.subr.bf16.mxu0 0
    %854 = vmatpush1.bf16.xpose.msra.mxu0 0
    %855 = vmatprep.subr.bf16.mxu0 0
    %856 = vmatpush1.bf16.xpose.msra.mxu0 0
    %857 = vmatprep.subr.bf16.mxu0 0
    %858 = vmatpush1.bf16.xpose.msra.mxu0 0
    %859 = vmatprep.subr.bf16.mxu0 0
    %860 = vmatpush1.bf16.xpose.msra.mxu0 0
    %861 = vmatprep.subr.bf16.mxu0 0
    %862 = vmatpush1.bf16.xpose.msra.mxu0 0
    %863 = vmatprep.subr.bf16.mxu0 0
    %864 = vmatpush1.bf16.xpose.msra.mxu0 0
    %865 = vmatprep.mubr.bf16.mxu0 0
    %866 = vmatmul.mubr.bf16.gmra.mrb[0].mxu0 %v810
    %v867 = vpop.f32.mrb[0].mxu0
    %v868 = vadd.f32 %v800, %v867
    %v869 = vpop.f32.mrb[0].mxu0
    %v870 = vpop.f32.mrb[0].mxu0
    %v871 = vadd.f32 %v801, %v870
    %v872 = vpop.f32.mrb[0].mxu0
    %873 = vmatprep.mubr.bf16.mxu0 0
    %874 = vmatmul.mubr.bf16.gmra.mrb[0].mxu0 %v813
    %v875 = vpop.f32.mrb[0].mxu0
    %v876 = vadd.f32 %v802, %v875
    %v877 = vpop.f32.mrb[0].mxu0
    %v878 = vpop.f32.mrb[0].mxu0
    %v879 = vadd.f32 %v803, %v878
    %v880 = vpop.f32.mrb[0].mxu0
    %881 = vmatprep.mubr.bf16.mxu0 0
    %882 = vmatmul.mubr.bf16.gmra.mrb[0].mxu0 %v816
    %v883 = vpop.f32.mrb[0].mxu0
    %v884 = vadd.f32 %v804, %v883
    %v885 = vpop.f32.mrb[0].mxu0
    %v886 = vpop.f32.mrb[0].mxu0
    %v887 = vadd.f32 %v805, %v886
    %v888 = vpop.f32.mrb[0].mxu0
    %889 = vmatprep.mubr.bf16.mxu0 0
    %890 = vmatmul.mubr.bf16.gmra.mrb[0].mxu0 %v819
    %v891 = vpop.f32.mrb[0].mxu0
    %v892 = vadd.f32 %v806, %v891
    %v893 = vpop.f32.mrb[0].mxu0
    %v894 = vpop.f32.mrb[0].mxu0
    %v895 = vadd.f32 %v807, %v894
    %v896 = vpop.f32.mrb[0].mxu0
    %897 = vdwg.mxu0
    %v898 = vsel %vm109, %v868, -inf
    %899 = vmax.xlane.f32.xlu0 %v898
    %v900 = vpop.xlane.xlu0 %899
    %v901 = vsel %vm109, %v871, -inf
    %902 = vmax.xlane.f32.xlu0 %v901
    %v903 = vpop.xlane.xlu0 %902
    %v904 = vsel %vm109, %v876, -inf
    %905 = vmax.xlane.f32.xlu0 %v904
    %v906 = vpop.xlane.xlu0 %905
    %v907 = vsel %vm109, %v879, -inf
    %908 = vmax.xlane.f32.xlu0 %v907
    %v909 = vpop.xlane.xlu0 %908
    %v910 = vsel %vm109, %v884, -inf
    %911 = vmax.xlane.f32.xlu0 %v910
    %v912 = vpop.xlane.xlu0 %911
    %v913 = vsel %vm109, %v887, -inf
    %914 = vmax.xlane.f32.xlu0 %v913
    %v915 = vpop.xlane.xlu0 %914
    %v916 = vsel %vm109, %v892, -inf
    %917 = vmax.xlane.f32.xlu0 %v916
    %v918 = vpop.xlane.xlu0 %917
    %v919 = vsel %vm109, %v895, -inf
    %920 = vmax.xlane.f32.xlu0 %v919
    %v921 = vpop.xlane.xlu0 %920
    %v922 = vsub.f32 %v868, %v900
    %v923 = vsub.f32 %v871, %v903
    %v924 = vsub.f32 %v876, %v906
    %v925 = vsub.f32 %v879, %v909
    %v926 = vsub.f32 %v884, %v912
    %v927 = vsub.f32 %v887, %v915
    %v928 = vsub.f32 %v892, %v918
    %v929 = vsub.f32 %v895, %v921
    %v930 = vmul.f32 %v922, 1.442695
    %v931 = vpow.pop %v930
    %v932 = vmul.f32 %v923, 1.442695
    %v933 = vpow.pop %v932
    %v934 = vmul.f32 %v924, 1.442695
    %v935 = vpow.pop %v934
    %v936 = vmul.f32 %v925, 1.442695
    %v937 = vpow.pop %v936
    %v938 = vmul.f32 %v926, 1.442695
    %v939 = vpow.pop %v938
    %v940 = vmul.f32 %v927, 1.442695
    %v941 = vpow.pop %v940
    %v942 = vmul.f32 %v928, 1.442695
    %v943 = vpow.pop %v942
    %v944 = vmul.f32 %v929, 1.442695
    %v945 = vpow.pop %v944
    %v946 = vsel %vm109, %v931, 0.0
    %947 = vadd.xlane.f32.xlu0 %v946
    %v948 = vpop.xlane.xlu0 %947
    %v949 = vsel %vm109, %v933, 0.0
    %950 = vadd.xlane.f32.xlu0 %v949
    %v951 = vpop.xlane.xlu0 %950
    %v952 = vsel %vm109, %v935, 0.0
    %953 = vadd.xlane.f32.xlu0 %v952
    %v954 = vpop.xlane.xlu0 %953
    %v955 = vsel %vm109, %v937, 0.0
    %956 = vadd.xlane.f32.xlu0 %v955
    %v957 = vpop.xlane.xlu0 %956
    %v958 = vsel %vm109, %v939, 0.0
    %959 = vadd.xlane.f32.xlu0 %v958
    %v960 = vpop.xlane.xlu0 %959
    %v961 = vsel %vm109, %v941, 0.0
    %962 = vadd.xlane.f32.xlu0 %v961
    %v963 = vpop.xlane.xlu0 %962
    %v964 = vsel %vm109, %v943, 0.0
    %965 = vadd.xlane.f32.xlu0 %v964
    %v966 = vpop.xlane.xlu0 %965
    %v967 = vsel %vm109, %v945, 0.0
    %968 = vadd.xlane.f32.xlu0 %v967
    %v969 = vpop.xlane.xlu0 %968
    %v970 = vrcp.pop %v948
    %v971 = vrcp.pop %v951
    %v972 = vrcp.pop %v954
    %v973 = vrcp.pop %v957
    %v974 = vrcp.pop %v960
    %v975 = vrcp.pop %v963
    %v976 = vrcp.pop %v966
    %v977 = vrcp.pop %v969
    %v978 = vmul.f32 %v931, %v970
    %v979 = vmul.f32 %v933, %v971
    %v980 = vmul.f32 %v935, %v972
    %v981 = vmul.f32 %v937, %v973
    %v982 = vmul.f32 %v939, %v974
    %v983 = vmul.f32 %v941, %v975
    %v984 = vmul.f32 %v943, %v976
    %v985 = vmul.f32 %v945, %v977
    %v986 = vpack.c.bf16 %v979, %v978
    %v987 = vpack.c.bf16 %v981, %v980
    %v988 = vpack.c.bf16 %v983, %v982
    %v989 = vpack.c.bf16 %v985, %v984
    %v991 = vsel %vm109, %v986, 0
    %v994 = vsel %vm109, %v987, 0
    %v997 = vsel %vm109, %v988, 0
    %v1000 = vsel %vm109, %v989, 0
    %1002 = vmatprep.subr.bf16.mxu0 0
    %1003 = vmatpush1.bf16.msra.mxu0 %v796
    %1004 = vmatprep.subr.bf16.mxu0 0
    %1005 = vmatpush1.bf16.msra.mxu0 %v797
    %1006 = vmatprep.subr.bf16.mxu0 0
    %1007 = vmatpush1.bf16.msra.mxu0 %v798
    %1008 = vmatprep.subr.bf16.mxu0 0
    %1009 = vmatpush1.bf16.msra.mxu0 %v799
    %1010 = vmatprep.subr.bf16.mxu0 0
    %1011 = vmatpush1.bf16.msra.mxu0 0
    %1012 = vmatprep.subr.bf16.mxu0 0
    %1013 = vmatpush1.bf16.msra.mxu0 0
    %1014 = vmatprep.subr.bf16.mxu0 0
    %1015 = vmatpush1.bf16.msra.mxu0 0
    %1016 = vmatprep.subr.bf16.mxu0 0
    %1017 = vmatpush1.bf16.msra.mxu0 0
    %1018 = vmatprep.subr.bf16.mxu0 0
    %1019 = vmatpush1.bf16.msra.mxu0 0
    %1020 = vmatprep.subr.bf16.mxu0 0
    %1021 = vmatpush1.bf16.msra.mxu0 0
    %1022 = vmatprep.subr.bf16.mxu0 0
    %1023 = vmatpush1.bf16.msra.mxu0 0
    %1024 = vmatprep.subr.bf16.mxu0 0
    %1025 = vmatpush1.bf16.msra.mxu0 0
    %1026 = vmatprep.subr.bf16.mxu0 0
    %1027 = vmatpush1.bf16.msra.mxu0 0
    %1028 = vmatprep.subr.bf16.mxu0 0
    %1029 = vmatpush1.bf16.msra.mxu0 0
    %1030 = vmatprep.subr.bf16.mxu0 0
    %1031 = vmatpush1.bf16.msra.mxu0 0
    %1032 = vmatprep.subr.bf16.mxu0 0
    %1033 = vmatpush1.bf16.msra.mxu0 0
    %1034 = vmatprep.mubr.bf16.mxu0 0
    %1035 = vmatmul.mubr.bf16.gmra.mrb[0].mxu0 %v991
    %v1036 = vpop.f32.mrb[0].mxu0
    %v1037 = vadd.f32 0.0, %v1036
    %v1038 = vpop.f32.mrb[0].mxu0
    %v1039 = vpop.f32.mrb[0].mxu0
    %v1040 = vadd.f32 0.0, %v1039
    %v1041 = vpop.f32.mrb[0].mxu0
    %1042 = vmatprep.mubr.bf16.mxu0 0
    %1043 = vmatmul.mubr.bf16.gmra.mrb[0].mxu0 %v994
    %v1044 = vpop.f32.mrb[0].mxu0
    %v1045 = vadd.f32 0.0, %v1044
    %v1046 = vpop.f32.mrb[0].mxu0
    %v1047 = vpop.f32.mrb[0].mxu0
    %v1048 = vadd.f32 0.0, %v1047
    %v1049 = vpop.f32.mrb[0].mxu0
    %1050 = vmatprep.mubr.bf16.mxu0 0
    %1051 = vmatmul.mubr.bf16.gmra.mrb[0].mxu0 %v997
    %v1052 = vpop.f32.mrb[0].mxu0
    %v1053 = vadd.f32 0.0, %v1052
    %v1054 = vpop.f32.mrb[0].mxu0
    %v1055 = vpop.f32.mrb[0].mxu0
    %v1056 = vadd.f32 0.0, %v1055
    %v1057 = vpop.f32.mrb[0].mxu0
    %1058 = vmatprep.mubr.bf16.mxu0 0
    %1059 = vmatmul.mubr.bf16.gmra.mrb[0].mxu0 %v1000
    %v1060 = vpop.f32.mrb[0].mxu0
    %v1061 = vadd.f32 0.0, %v1060
    %v1062 = vpop.f32.mrb[0].mxu0
    %v1063 = vpop.f32.mrb[0].mxu0
    %v1064 = vadd.f32 0.0, %v1063
    %v1065 = vpop.f32.mrb[0].mxu0
    %1066 = vdwg.mxu0
    %v1067 = vpack.c.bf16 %v1040, %v1037
    %v1068 = vpack.c.bf16 %v1048, %v1045
    %v1069 = vpack.c.bf16 %v1056, %v1053
    %v1070 = vpack.c.bf16 %v1064, %v1061
    %v1071 = vld [vmem:[#allocation8] sm:$0xf]
    %v1072 = vld [vmem:[#allocation8 + $0x4] sm:$0xf]
    %v1073 = vld [vmem:[#allocation8 + $0x8] sm:$0xf]
    %v1074 = vld [vmem:[#allocation8 + $0xc] sm:$0xf]
    %v1075 = vld [vmem:[#allocation8 + $0x10] sm:$0xf]
    %v1076 = vld [vmem:[#allocation8 + $0x14] sm:$0xf]
    %v1077 = vld [vmem:[#allocation8 + $0x18] sm:$0xf]
    %v1078 = vld [vmem:[#allocation8 + $0x1c] sm:$0xf]
    %v1081 = vunpack.c.l.b16 %v1071
    %v1082 = vunpack.c.l.b16 %v1072
    %v1083 = vpack.c.b16 %v1082, %v1081
    %v1086 = vsel %vm808, %v1067, 0
    %1088 = vmatprep.subr.bf16.mxu0 0
    %1089 = vmatpush1.bf16.msra.mxu0 %v1083
    %1090 = vmatprep.subr.bf16.mxu0 0
    %1091 = vmatpush1.bf16.msra.mxu0 0
    %1092 = vmatprep.subr.bf16.mxu0 0
    %1093 = vmatpush1.bf16.msra.mxu0 0
    %1094 = vmatprep.subr.bf16.mxu0 0
    %1095 = vmatpush1.bf16.msra.mxu0 0
    %1096 = vmatprep.subr.bf16.mxu0 0
    %1097 = vmatpush1.bf16.msra.mxu0 0
    %1098 = vmatprep.subr.bf16.mxu0 0
    %1099 = vmatpush1.bf16.msra.mxu0 0
    %1100 = vmatprep.subr.bf16.mxu0 0
    %1101 = vmatpush1.bf16.msra.mxu0 0
    %1102 = vmatprep.subr.bf16.mxu0 0
    %1103 = vmatpush1.bf16.msra.mxu0 0
    %1104 = vmatprep.subr.bf16.mxu0 0
    %1105 = vmatpush1.bf16.msra.mxu0 0
    %1106 = vmatprep.subr.bf16.mxu0 0
    %1107 = vmatpush1.bf16.msra.mxu0 0
    %1108 = vmatprep.subr.bf16.mxu0 0
    %1109 = vmatpush1.bf16.msra.mxu0 0
    %1110 = vmatprep.subr.bf16.mxu0 0
    %1111 = vmatpush1.bf16.msra.mxu0 0
    %1112 = vmatprep.subr.bf16.mxu0 0
    %1113 = vmatpush1.bf16.msra.mxu0 0
    %1114 = vmatprep.subr.bf16.mxu0 0
    %1115 = vmatpush1.bf16.msra.mxu0 0
    %1116 = vmatprep.subr.bf16.mxu0 0
    %1117 = vmatpush1.bf16.msra.mxu0 0
    %1118 = vmatprep.subr.bf16.mxu0 0
    %1119 = vmatpush1.bf16.msra.mxu0 0
    %1120 = vmatprep.mubr.bf16.mxu0 0
    %1121 = vmatmul.mubr.bf16.gmra.mrb[0].mxu0 %v1086
    %v1122 = vpop.f32.mrb[0].mxu0
    %v1123 = vadd.f32 0.0, %v1122
    %v1124 = vpop.f32.mrb[0].mxu0
    %v1125 = vpop.f32.mrb[0].mxu0
    %v1126 = vadd.f32 0.0, %v1125
    %v1127 = vpop.f32.mrb[0].mxu0
    %1128 = vdwg.mxu0
    %v1131 = vunpack.c.l.b16 %v1073
    %v1132 = vunpack.c.l.b16 %v1074
    %v1133 = vpack.c.b16 %v1132, %v1131
    %v1136 = vsel %vm808, %v1068, 0
    %1138 = vmatprep.subr.bf16.mxu0 0
    %1139 = vmatpush1.bf16.msra.mxu0 %v1133
    %1140 = vmatprep.subr.bf16.mxu0 0
    %1141 = vmatpush1.bf16.msra.mxu0 0
    %1142 = vmatprep.subr.bf16.mxu0 0
    %1143 = vmatpush1.bf16.msra.mxu0 0
    %1144 = vmatprep.subr.bf16.mxu0 0
    %1145 = vmatpush1.bf16.msra.mxu0 0
    %1146 = vmatprep.subr.bf16.mxu0 0
    %1147 = vmatpush1.bf16.msra.mxu0 0
    %1148 = vmatprep.subr.bf16.mxu0 0
    %1149 = vmatpush1.bf16.msra.mxu0 0
    %1150 = vmatprep.subr.bf16.mxu0 0
    %1151 = vmatpush1.bf16.msra.mxu0 0
    %1152 = vmatprep.subr.bf16.mxu0 0
    %1153 = vmatpush1.bf16.msra.mxu0 0
    %1154 = vmatprep.subr.bf16.mxu0 0
    %1155 = vmatpush1.bf16.msra.mxu0 0
    %1156 = vmatprep.subr.bf16.mxu0 0
    %1157 = vmatpush1.bf16.msra.mxu0 0
    %1158 = vmatprep.subr.bf16.mxu0 0
    %1159 = vmatpush1.bf16.msra.mxu0 0
    %1160 = vmatprep.subr.bf16.mxu0 0
    %1161 = vmatpush1.bf16.msra.mxu0 0
    %1162 = vmatprep.subr.bf16.mxu0 0
    %1163 = vmatpush1.bf16.msra.mxu0 0
    %1164 = vmatprep.subr.bf16.mxu0 0
    %1165 = vmatpush1.bf16.msra.mxu0 0
    %1166 = vmatprep.subr.bf16.mxu0 0
    %1167 = vmatpush1.bf16.msra.mxu0 0
    %1168 = vmatprep.subr.bf16.mxu0 0
    %1169 = vmatpush1.bf16.msra.mxu0 0
    %1170 = vmatprep.mubr.bf16.mxu0 0
    %1171 = vmatmul.mubr.bf16.gmra.mrb[0].mxu0 %v1136
    %v1172 = vpop.f32.mrb[0].mxu0
    %v1173 = vadd.f32 0.0, %v1172
    %v1174 = vpop.f32.mrb[0].mxu0
    %v1175 = vpop.f32.mrb[0].mxu0
    %v1176 = vadd.f32 0.0, %v1175
    %v1177 = vpop.f32.mrb[0].mxu0
    %1178 = vdwg.mxu0
    %v1181 = vunpack.c.l.b16 %v1075
    %v1182 = vunpack.c.l.b16 %v1076
    %v1183 = vpack.c.b16 %v1182, %v1181
    %v1186 = vsel %vm808, %v1069, 0
    %1188 = vmatprep.subr.bf16.mxu0 0
    %1189 = vmatpush1.bf16.msra.mxu0 %v1183
    %1190 = vmatprep.subr.bf16.mxu0 0
    %1191 = vmatpush1.bf16.msra.mxu0 0
    %1192 = vmatprep.subr.bf16.mxu0 0
    %1193 = vmatpush1.bf16.msra.mxu0 0
    %1194 = vmatprep.subr.bf16.mxu0 0
    %1195 = vmatpush1.bf16.msra.mxu0 0
    %1196 = vmatprep.subr.bf16.mxu0 0
    %1197 = vmatpush1.bf16.msra.mxu0 0
    %1198 = vmatprep.subr.bf16.mxu0 0
    %1199 = vmatpush1.bf16.msra.mxu0 0
    %1200 = vmatprep.subr.bf16.mxu0 0
    %1201 = vmatpush1.bf16.msra.mxu0 0
    %1202 = vmatprep.subr.bf16.mxu0 0
    %1203 = vmatpush1.bf16.msra.mxu0 0
    %1204 = vmatprep.subr.bf16.mxu0 0
    %1205 = vmatpush1.bf16.msra.mxu0 0
    %1206 = vmatprep.subr.bf16.mxu0 0
    %1207 = vmatpush1.bf16.msra.mxu0 0
    %1208 = vmatprep.subr.bf16.mxu0 0
    %1209 = vmatpush1.bf16.msra.mxu0 0
    %1210 = vmatprep.subr.bf16.mxu0 0
    %1211 = vmatpush1.bf16.msra.mxu0 0
    %1212 = vmatprep.subr.bf16.mxu0 0
    %1213 = vmatpush1.bf16.msra.mxu0 0
    %1214 = vmatprep.subr.bf16.mxu0 0
    %1215 = vmatpush1.bf16.msra.mxu0 0
    %1216 = vmatprep.subr.bf16.mxu0 0
    %1217 = vmatpush1.bf16.msra.mxu0 0
    %1218 = vmatprep.subr.bf16.mxu0 0
    %1219 = vmatpush1.bf16.msra.mxu0 0
    %1220 = vmatprep.mubr.bf16.mxu0 0
    %1221 = vmatmul.mubr.bf16.gmra.mrb[0].mxu0 %v1186
    %v1222 = vpop.f32.mrb[0].mxu0
    %v1223 = vadd.f32 0.0, %v1222
    %v1224 = vpop.f32.mrb[0].mxu0
    %v1225 = vpop.f32.mrb[0].mxu0
    %v1226 = vadd.f32 0.0, %v1225
    %v1227 = vpop.f32.mrb[0].mxu0
    %1228 = vdwg.mxu0
    %v1231 = vunpack.c.l.b16 %v1077
    %v1232 = vunpack.c.l.b16 %v1078
    %v1233 = vpack.c.b16 %v1232, %v1231
    %v1236 = vsel %vm808, %v1070, 0
    %1238 = vmatprep.subr.bf16.mxu0 0
    %1239 = vmatpush1.bf16.msra.mxu0 %v1233
    %1240 = vmatprep.subr.bf16.mxu0 0
    %1241 = vmatpush1.bf16.msra.mxu0 0
    %1242 = vmatprep.subr.bf16.mxu0 0
    %1243 = vmatpush1.bf16.msra.mxu0 0
    %1244 = vmatprep.subr.bf16.mxu0 0
    %1245 = vmatpush1.bf16.msra.mxu0 0
    %1246 = vmatprep.subr.bf16.mxu0 0
    %1247 = vmatpush1.bf16.msra.mxu0 0
    %1248 = vmatprep.subr.bf16.mxu0 0
    %1249 = vmatpush1.bf16.msra.mxu0 0
    %1250 = vmatprep.subr.bf16.mxu0 0
    %1251 = vmatpush1.bf16.msra.mxu0 0
    %1252 = vmatprep.subr.bf16.mxu0 0
    %1253 = vmatpush1.bf16.msra.mxu0 0
    %1254 = vmatprep.subr.bf16.mxu0 0
    %1255 = vmatpush1.bf16.msra.mxu0 0
    %1256 = vmatprep.subr.bf16.mxu0 0
    %1257 = vmatpush1.bf16.msra.mxu0 0
    %1258 = vmatprep.subr.bf16.mxu0 0
    %1259 = vmatpush1.bf16.msra.mxu0 0
    %1260 = vmatprep.subr.bf16.mxu0 0
    %1261 = vmatpush1.bf16.msra.mxu0 0
    %1262 = vmatprep.subr.bf16.mxu0 0
    %1263 = vmatpush1.bf16.msra.mxu0 0
    %1264 = vmatprep.subr.bf16.mxu0 0
    %1265 = vmatpush1.bf16.msra.mxu0 0
    %1266 = vmatprep.subr.bf16.mxu0 0
    %1267 = vmatpush1.bf16.msra.mxu0 0
    %1268 = vmatprep.subr.bf16.mxu0 0
    %1269 = vmatpush1.bf16.msra.mxu0 0
    %1270 = vmatprep.mubr.bf16.mxu0 0
    %1271 = vmatmul.mubr.bf16.gmra.mrb[0].mxu0 %v1236
    %v1272 = vpop.f32.mrb[0].mxu0
    %v1273 = vadd.f32 0.0, %v1272
    %v1274 = vpop.f32.mrb[0].mxu0
    %v1275 = vpop.f32.mrb[0].mxu0
    %v1276 = vadd.f32 0.0, %v1275
    %v1277 = vpop.f32.mrb[0].mxu0
    %1278 = vdwg.mxu0
    %v1279 = vsel %vm109, %v1123, 0.0
    %v1280 = vsel %vm109, %v1173, 0.0
    %v1281 = vadd.f32 %v1279, %v1280
    %v1282 = vsel %vm109, %v1223, 0.0
    %v1283 = vadd.f32 %v1281, %v1282
    %v1284 = vsel %vm109, %v1273, 0.0
    %v1285 = vadd.f32 %v1283, %v1284
    %v1286 = vsel %vm109, %v1126, 0.0
    %v1287 = vsel %vm109, %v1176, 0.0
    %v1288 = vadd.f32 %v1286, %v1287
    %v1289 = vsel %vm109, %v1226, 0.0
    %v1290 = vadd.f32 %v1288, %v1289
    %v1291 = vsel %vm109, %v1276, 0.0
    %v1292 = vadd.f32 %v1290, %v1291
    %v1293 = vadd.f32 %v105, %v1285
    %v1294 = vadd.f32 %v106, %v1292
    %v1295 = vmul.f32 %v1293, %v1293
    %v1296 = vmul.f32 %v1294, %v1294
    %v1297 = vsel %vm109, %v1295, 0.0
    %1298 = vadd.xlane.f32.xlu0 %v1297
    %v1299 = vpop.xlane.xlu0 %1298
    %v1300 = vsel %vm109, %v1296, 0.0
    %1301 = vadd.xlane.f32.xlu0 %v1300
    %v1302 = vpop.xlane.xlu0 %1301
    %v1303 = vmul.f32 %v1299, %v116
    %v1304 = vmul.f32 %v1302, %v116
    %v1305 = vadd.f32 %v1303, 1e-06
    %v1306 = vadd.f32 %v1304, 1e-06
    %v1307 = vrsqrt.pop %v1305
    %v1308 = vrsqrt.pop %v1306
    %v1309 = vmul.f32 %v1293, %v1307
    %v1310 = vmul.f32 %v1294, %v1308
    %v1311 = vld [vmem:[%s7] sm:$0x1]
    %v1313 = vlaneseq
    %v1314 = vshrl.u32 %v1313, 7
    %v1315 = vsub.s32 0, %v1314
    %v1316 = vrot.slane %v1311, %v1315
    %v1318 = vmul.f32 %v1309, %v1316
    %v1319 = vmul.f32 %v1310, %v1316
    %v1320 = vpack.c.bf16 %v1319, %v1318
    %v1321 = vld [vmem:[#allocation10] sm:$0xff]
    %v1322 = vld [vmem:[#allocation10 + $0x8] sm:$0xff]
    %v1323 = vld [vmem:[#allocation10 + $0x10] sm:$0xff]
    %v1324 = vld [vmem:[#allocation10 + $0x18] sm:$0xff]
    %v1325 = vld [vmem:[#allocation10 + $0x20] sm:$0xff]
    %v1326 = vld [vmem:[#allocation10 + $0x28] sm:$0xff]
    %v1327 = vld [vmem:[#allocation10 + $0x30] sm:$0xff]
    %v1328 = vld [vmem:[#allocation10 + $0x38] sm:$0xff]
    %v1329 = vld [vmem:[#allocation10 + $0x40] sm:$0xff]
    %v1330 = vld [vmem:[#allocation10 + $0x48] sm:$0xff]
    %v1331 = vld [vmem:[#allocation10 + $0x50] sm:$0xff]
    %v1332 = vld [vmem:[#allocation10 + $0x58] sm:$0xff]
    %v1333 = vld [vmem:[#allocation10 + $0x60] sm:$0xff]
    %v1334 = vld [vmem:[#allocation10 + $0x68] sm:$0xff]
    %v1335 = vld [vmem:[#allocation10 + $0x70] sm:$0xff]
    %v1336 = vld [vmem:[#allocation10 + $0x78] sm:$0xff]
    %v1353 = vunpack.c.l.b16 %v1321
    %v1354 = vunpack.c.h.b16 %v1321
    %v1355 = vunpack.c.l.b16 %v1322
    %v1356 = vunpack.c.h.b16 %v1322
    %v1357 = vunpack.c.l.b16 %v1323
    %v1358 = vunpack.c.h.b16 %v1323
    %v1359 = vunpack.c.l.b16 %v1324
    %v1360 = vunpack.c.h.b16 %v1324
    %v1361 = vunpack.c.l.b16 %v1325
    %v1362 = vunpack.c.h.b16 %v1325
    %v1363 = vunpack.c.l.b16 %v1326
    %v1364 = vunpack.c.h.b16 %v1326
    %v1365 = vunpack.c.l.b16 %v1327
    %v1366 = vunpack.c.h.b16 %v1327
    %v1367 = vunpack.c.l.b16 %v1328
    %v1368 = vunpack.c.h.b16 %v1328
    %v1369 = vunpack.c.l.b16 %v1329
    %v1370 = vunpack.c.h.b16 %v1329
    %v1371 = vunpack.c.l.b16 %v1330
    %v1372 = vunpack.c.h.b16 %v1330
    %v1373 = vunpack.c.l.b16 %v1331
    %v1374 = vunpack.c.h.b16 %v1331
    %v1375 = vunpack.c.l.b16 %v1332
    %v1376 = vunpack.c.h.b16 %v1332
    %v1377 = vunpack.c.l.b16 %v1333
    %v1378 = vunpack.c.h.b16 %v1333
    %v1379 = vunpack.c.l.b16 %v1334
    %v1380 = vunpack.c.h.b16 %v1334
    %v1381 = vunpack.c.l.b16 %v1335
    %v1382 = vunpack.c.h.b16 %v1335
    %v1383 = vunpack.c.l.b16 %v1336
    %v1384 = vunpack.c.h.b16 %v1336
    %v1385 = vpack.c.b16 %v1357, %v1353
    %v1386 = vpack.c.b16 %v1358, %v1354
    %v1387 = vpack.c.b16 %v1359, %v1355
    %v1388 = vpack.c.b16 %v1360, %v1356
    %v1389 = vpack.c.b16 %v1365, %v1361
    %v1390 = vpack.c.b16 %v1366, %v1362
    %v1391 = vpack.c.b16 %v1367, %v1363
    %v1392 = vpack.c.b16 %v1368, %v1364
    %v1393 = vpack.c.b16 %v1373, %v1369
    %v1394 = vpack.c.b16 %v1374, %v1370
    %v1395 = vpack.c.b16 %v1375, %v1371
    %v1396 = vpack.c.b16 %v1376, %v1372
    %v1397 = vpack.c.b16 %v1381, %v1377
    %v1398 = vpack.c.b16 %v1382, %v1378
    %v1399 = vpack.c.b16 %v1383, %v1379
    %v1400 = vpack.c.b16 %v1384, %v1380
    %v1418 = vsel %vm109, %v1320, 0
    %1420 = vmatprep.subr.bf16.mxu0 %v1386
    %1421 = vmatpush1.bf16.msra.mxu0 %v1385
    %1422 = vmatprep.subr.bf16.mxu0 %v1390
    %1423 = vmatpush1.bf16.msra.mxu0 %v1389
    %1424 = vmatprep.subr.bf16.mxu0 %v1394
    %1425 = vmatpush1.bf16.msra.mxu0 %v1393
    %1426 = vmatprep.subr.bf16.mxu0 %v1398
    %1427 = vmatpush1.bf16.msra.mxu0 %v1397
    %1428 = vmatprep.subr.bf16.mxu0 0
    %1429 = vmatpush1.bf16.msra.mxu0 0
    %1430 = vmatprep.subr.bf16.mxu0 0
    %1431 = vmatpush1.bf16.msra.mxu0 0
    %1432 = vmatprep.subr.bf16.mxu0 0
    %1433 = vmatpush1.bf16.msra.mxu0 0
    %1434 = vmatprep.subr.bf16.mxu0 0
    %1435 = vmatpush1.bf16.msra.mxu0 0
    %1436 = vmatprep.subr.bf16.mxu0 0
    %1437 = vmatpush1.bf16.msra.mxu0 0
    %1438 = vmatprep.subr.bf16.mxu0 0
    %1439 = vmatpush1.bf16.msra.mxu0 0
    %1440 = vmatprep.subr.bf16.mxu0 0
    %1441 = vmatpush1.bf16.msra.mxu0 0
    %1442 = vmatprep.subr.bf16.mxu0 0
    %1443 = vmatpush1.bf16.msra.mxu0 0
    %1444 = vmatprep.subr.bf16.mxu0 0
    %1445 = vmatpush1.bf16.msra.mxu0 0
    %1446 = vmatprep.subr.bf16.mxu0 0
    %1447 = vmatpush1.bf16.msra.mxu0 0
    %1448 = vmatprep.subr.bf16.mxu0 0
    %1449 = vmatpush1.bf16.msra.mxu0 0
    %1450 = vmatprep.subr.bf16.mxu0 0
    %1451 = vmatpush1.bf16.msra.mxu0 0
    %1452 = vmatprep.mubr.bf16.mxu0 0
    %1453 = vmatmul.mubr.bf16.gmra.mrb[0].mxu0 %v1418
    %v1454 = vpop.f32.mrb[0].mxu0
    %v1455 = vadd.f32 0.0, %v1454
    %v1456 = vpop.f32.mrb[0].mxu0
    %v1457 = vadd.f32 0.0, %v1456
    %v1458 = vpop.f32.mrb[0].mxu0
    %v1459 = vadd.f32 0.0, %v1458
    %v1460 = vpop.f32.mrb[0].mxu0
    %v1461 = vadd.f32 0.0, %v1460
    %1462 = vdwg.mxu0
    %1463 = vmatprep.subr.bf16.mxu0 %v1388
    %1464 = vmatpush1.bf16.msra.mxu0 %v1387
    %1465 = vmatprep.subr.bf16.mxu0 %v1392
    %1466 = vmatpush1.bf16.msra.mxu0 %v1391
    %1467 = vmatprep.subr.bf16.mxu0 %v1396
    %1468 = vmatpush1.bf16.msra.mxu0 %v1395
    %1469 = vmatprep.subr.bf16.mxu0 %v1400
    %1470 = vmatpush1.bf16.msra.mxu0 %v1399
    %1471 = vmatprep.subr.bf16.mxu0 0
    %1472 = vmatpush1.bf16.msra.mxu0 0
    %1473 = vmatprep.subr.bf16.mxu0 0
    %1474 = vmatpush1.bf16.msra.mxu0 0
    %1475 = vmatprep.subr.bf16.mxu0 0
    %1476 = vmatpush1.bf16.msra.mxu0 0
    %1477 = vmatprep.subr.bf16.mxu0 0
    %1478 = vmatpush1.bf16.msra.mxu0 0
    %1479 = vmatprep.subr.bf16.mxu0 0
    %1480 = vmatpush1.bf16.msra.mxu0 0
    %1481 = vmatprep.subr.bf16.mxu0 0
    %1482 = vmatpush1.bf16.msra.mxu0 0
    %1483 = vmatprep.subr.bf16.mxu0 0
    %1484 = vmatpush1.bf16.msra.mxu0 0
    %1485 = vmatprep.subr.bf16.mxu0 0
    %1486 = vmatpush1.bf16.msra.mxu0 0
    %1487 = vmatprep.subr.bf16.mxu0 0
    %1488 = vmatpush1.bf16.msra.mxu0 0
    %1489 = vmatprep.subr.bf16.mxu0 0
    %1490 = vmatpush1.bf16.msra.mxu0 0
    %1491 = vmatprep.subr.bf16.mxu0 0
    %1492 = vmatpush1.bf16.msra.mxu0 0
    %1493 = vmatprep.subr.bf16.mxu0 0
    %1494 = vmatpush1.bf16.msra.mxu0 0
    %1495 = vmatprep.mubr.bf16.mxu0 0
    %1496 = vmatmul.mubr.bf16.gmra.mrb[0].mxu0 %v1418
    %v1497 = vpop.f32.mrb[0].mxu0
    %v1498 = vadd.f32 0.0, %v1497
    %v1499 = vpop.f32.mrb[0].mxu0
    %v1500 = vadd.f32 0.0, %v1499
    %v1501 = vpop.f32.mrb[0].mxu0
    %v1502 = vadd.f32 0.0, %v1501
    %v1503 = vpop.f32.mrb[0].mxu0
    %v1504 = vadd.f32 0.0, %v1503
    %1505 = vdwg.mxu0
    %v1506 = vxor.u32 %v1498, 2147483648
    %v1507 = vxor.u32 %v1500, 2147483648
    %v1508 = vxor.u32 %v1502, 2147483648
    %v1509 = vxor.u32 %v1504, 2147483648
    %v1510 = vmul.f32 %v1506, 1.442695
    %v1511 = vpow.pop %v1510
    %v1512 = vmul.f32 %v1507, 1.442695
    %v1513 = vpow.pop %v1512
    %v1514 = vmul.f32 %v1508, 1.442695
    %v1515 = vpow.pop %v1514
    %v1516 = vmul.f32 %v1509, 1.442695
    %v1517 = vpow.pop %v1516
    %v1518 = vadd.f32 %v1511, 1.0
    %v1519 = vadd.f32 %v1513, 1.0
    %v1520 = vadd.f32 %v1515, 1.0
    %v1521 = vadd.f32 %v1517, 1.0
    %v1522 = vrcp.pop %v1518
    %v1523 = vmul.f32 1.0, %v1522
    %v1524 = vrcp.pop %v1519
    %v1525 = vmul.f32 1.0, %v1524
    %v1526 = vrcp.pop %v1520
    %v1527 = vmul.f32 1.0, %v1526
    %v1528 = vrcp.pop %v1521
    %v1529 = vmul.f32 1.0, %v1528
    %v1530 = vmul.f32 %v1498, %v1523
    %v1531 = vmul.f32 %v1500, %v1525
    %v1532 = vmul.f32 %v1502, %v1527
    %v1533 = vmul.f32 %v1504, %v1529
    %v1534 = vmul.f32 %v1455, %v1530
    %v1535 = vmul.f32 %v1457, %v1531
    %v1536 = vmul.f32 %v1459, %v1532
    %v1537 = vmul.f32 %v1461, %v1533
    %v1538 = vpack.c.bf16 %v1536, %v1534
    %v1539 = vpack.c.bf16 %v1537, %v1535
    %v1540 = vld [vmem:[%s9] sm:$0xf]
    %v1541 = vld [vmem:[%s9 + $0x4] sm:$0xf]
    %v1542 = vld [vmem:[%s9 + $0x8] sm:$0xf]
    %v1543 = vld [vmem:[%s9 + $0xc] sm:$0xf]
    %v1544 = vld [vmem:[%s9 + $0x10] sm:$0xf]
    %v1545 = vld [vmem:[%s9 + $0x14] sm:$0xf]
    %v1546 = vld [vmem:[%s9 + $0x18] sm:$0xf]
    %v1547 = vld [vmem:[%s9 + $0x1c] sm:$0xf]
    %v1548 = vld [vmem:[%s9 + $0x20] sm:$0xf]
    %v1549 = vld [vmem:[%s9 + $0x24] sm:$0xf]
    %v1550 = vld [vmem:[%s9 + $0x28] sm:$0xf]
    %v1551 = vld [vmem:[%s9 + $0x2c] sm:$0xf]
    %v1552 = vld [vmem:[%s9 + $0x30] sm:$0xf]
    %v1553 = vld [vmem:[%s9 + $0x34] sm:$0xf]
    %v1554 = vld [vmem:[%s9 + $0x38] sm:$0xf]
    %v1555 = vld [vmem:[%s9 + $0x3c] sm:$0xf]
    %v1556 = vld [vmem:[%s9 + $0x40] sm:$0xf]
    %v1557 = vld [vmem:[%s9 + $0x44] sm:$0xf]
    %v1558 = vld [vmem:[%s9 + $0x48] sm:$0xf]
    %v1559 = vld [vmem:[%s9 + $0x4c] sm:$0xf]
    %v1560 = vld [vmem:[%s9 + $0x50] sm:$0xf]
    %v1561 = vld [vmem:[%s9 + $0x54] sm:$0xf]
    %v1562 = vld [vmem:[%s9 + $0x58] sm:$0xf]
    %v1563 = vld [vmem:[%s9 + $0x5c] sm:$0xf]
    %v1564 = vld [vmem:[%s9 + $0x60] sm:$0xf]
    %v1565 = vld [vmem:[%s9 + $0x64] sm:$0xf]
    %v1566 = vld [vmem:[%s9 + $0x68] sm:$0xf]
    %v1567 = vld [vmem:[%s9 + $0x6c] sm:$0xf]
    %v1568 = vld [vmem:[%s9 + $0x70] sm:$0xf]
    %v1569 = vld [vmem:[%s9 + $0x74] sm:$0xf]
    %v1570 = vld [vmem:[%s9 + $0x78] sm:$0xf]
    %v1571 = vld [vmem:[%s9 + $0x7c] sm:$0xf]
    %v1604 = vunpack.c.l.b16 %v1540
    %v1605 = vunpack.c.l.b16 %v1541
    %v1606 = vunpack.c.l.b16 %v1542
    %v1607 = vunpack.c.l.b16 %v1543
    %v1608 = vunpack.c.l.b16 %v1544
    %v1609 = vunpack.c.l.b16 %v1545
    %v1610 = vunpack.c.l.b16 %v1546
    %v1611 = vunpack.c.l.b16 %v1547
    %v1612 = vunpack.c.l.b16 %v1548
    %v1613 = vunpack.c.l.b16 %v1549
    %v1614 = vunpack.c.l.b16 %v1550
    %v1615 = vunpack.c.l.b16 %v1551
    %v1616 = vunpack.c.l.b16 %v1552
    %v1617 = vunpack.c.l.b16 %v1553
    %v1618 = vunpack.c.l.b16 %v1554
    %v1619 = vunpack.c.l.b16 %v1555
    %v1620 = vunpack.c.l.b16 %v1556
    %v1621 = vunpack.c.l.b16 %v1557
    %v1622 = vunpack.c.l.b16 %v1558
    %v1623 = vunpack.c.l.b16 %v1559
    %v1624 = vunpack.c.l.b16 %v1560
    %v1625 = vunpack.c.l.b16 %v1561
    %v1626 = vunpack.c.l.b16 %v1562
    %v1627 = vunpack.c.l.b16 %v1563
    %v1628 = vunpack.c.l.b16 %v1564
    %v1629 = vunpack.c.l.b16 %v1565
    %v1630 = vunpack.c.l.b16 %v1566
    %v1631 = vunpack.c.l.b16 %v1567
    %v1632 = vunpack.c.l.b16 %v1568
    %v1633 = vunpack.c.l.b16 %v1569
    %v1634 = vunpack.c.l.b16 %v1570
    %v1635 = vunpack.c.l.b16 %v1571
    %v1636 = vpack.c.b16 %v1605, %v1604
    %v1637 = vpack.c.b16 %v1607, %v1606
    %v1638 = vpack.c.b16 %v1609, %v1608
    %v1639 = vpack.c.b16 %v1611, %v1610
    %v1640 = vpack.c.b16 %v1613, %v1612
    %v1641 = vpack.c.b16 %v1615, %v1614
    %v1642 = vpack.c.b16 %v1617, %v1616
    %v1643 = vpack.c.b16 %v1619, %v1618
    %v1644 = vpack.c.b16 %v1621, %v1620
    %v1645 = vpack.c.b16 %v1623, %v1622
    %v1646 = vpack.c.b16 %v1625, %v1624
    %v1647 = vpack.c.b16 %v1627, %v1626
    %v1648 = vpack.c.b16 %v1629, %v1628
    %v1649 = vpack.c.b16 %v1631, %v1630
    %v1650 = vpack.c.b16 %v1633, %v1632
    %v1651 = vpack.c.b16 %v1635, %v1634
    %1668 = vmatprep.subr.bf16.mxu0 0
    %1669 = vmatpush1.bf16.msra.mxu0 %v1636
    %1670 = vmatprep.subr.bf16.mxu0 0
    %1671 = vmatpush1.bf16.msra.mxu0 %v1637
    %1672 = vmatprep.subr.bf16.mxu0 0
    %1673 = vmatpush1.bf16.msra.mxu0 %v1638
    %1674 = vmatprep.subr.bf16.mxu0 0
    %1675 = vmatpush1.bf16.msra.mxu0 %v1639
    %1676 = vmatprep.subr.bf16.mxu0 0
    %1677 = vmatpush1.bf16.msra.mxu0 %v1640
    %1678 = vmatprep.subr.bf16.mxu0 0
    %1679 = vmatpush1.bf16.msra.mxu0 %v1641
    %1680 = vmatprep.subr.bf16.mxu0 0
    %1681 = vmatpush1.bf16.msra.mxu0 %v1642
    %1682 = vmatprep.subr.bf16.mxu0 0
    %1683 = vmatpush1.bf16.msra.mxu0 %v1643
    %1684 = vmatprep.subr.bf16.mxu0 0
    %1685 = vmatpush1.bf16.msra.mxu0 %v1644
    %1686 = vmatprep.subr.bf16.mxu0 0
    %1687 = vmatpush1.bf16.msra.mxu0 %v1645
    %1688 = vmatprep.subr.bf16.mxu0 0
    %1689 = vmatpush1.bf16.msra.mxu0 %v1646
    %1690 = vmatprep.subr.bf16.mxu0 0
    %1691 = vmatpush1.bf16.msra.mxu0 %v1647
    %1692 = vmatprep.subr.bf16.mxu0 0
    %1693 = vmatpush1.bf16.msra.mxu0 %v1648
    %1694 = vmatprep.subr.bf16.mxu0 0
    %1695 = vmatpush1.bf16.msra.mxu0 %v1649
    %1696 = vmatprep.subr.bf16.mxu0 0
    %1697 = vmatpush1.bf16.msra.mxu0 %v1650
    %1698 = vmatprep.subr.bf16.mxu0 0
    %1699 = vmatpush1.bf16.msra.mxu0 %v1651
    %1700 = vmatprep.mubr.bf16.mxu0 %v1539
    %1701 = vmatmul.mubr.bf16.gmra.mrb[0].mxu0 %v1538
    %v1702 = vpop.f32.mrb[0].mxu0
    %v1703 = vadd.f32 0.0, %v1702
    %v1704 = vpop.f32.mrb[0].mxu0
    %v1705 = vpop.f32.mrb[0].mxu0
    %v1706 = vadd.f32 0.0, %v1705
    %v1707 = vpop.f32.mrb[0].mxu0
    %1708 = vdwg.mxu0
    %v1709 = vadd.f32 %v1293, %v1703
    %v1710 = vadd.f32 %v1294, %v1706
    %1711 = vst.msk [vmem:[#allocation11] sm:$0xff] %vm109, %v1709
    %1712 = vst.msk [vmem:[#allocation11 + $0x8] sm:$0xff] %vm109, %v1710
    // Predicated region
    $region62: #{tpu_custom_call.1} parent=1 // pred_check
      _
    $region63: #{tpu_custom_call.1} parent=1 // pred_check_branch
      %1714 = sbr.rel (0) target = $region65
    $region64: #{tpu_custom_call.1} parent=1 // pred_region
      %s1716 = ssub.s32 256, 256
      %1717 = vsyncadd [#allocation4], %s1716
      %s1718 = sshll.u32 [#allocation11], 4
      %s1719 = int_to_ptr.vmem [resolvable:$true] %s1718
      %1724 = dma.vmem_to_hbm [thread:$0]  %s1719, 256, %s10, [#allocation4], 128, 128, 8
    $region65: #{tpu_custom_call.1} parent=1 // pred_fallthru
      _
    // Predicated region
    $region66: #{tpu_custom_call.1} parent=1 // pred_check
      _
    $region67: #{tpu_custom_call.1} parent=1 // pred_check_branch
      %1726 = sbr.rel (0) target = $region69
    $region68: #{tpu_custom_call.1} parent=1 // pred_region
      %1727 = dma.done [#allocation4], 256
    $region69: #{tpu_custom_call.1} parent=1 // pred_fallthru
      _
    %1728 = vsyncpa [#allocation3], 1
    %1729 = vsyncpa [#allocation6], 1
    %1730 = vsyncpa [#allocation9], 1
    %1731 = vsyncpa [#allocation4], 1

</llo_original>
